<compile_context>
chip_gen: v6e
topology: v6e:2x2x1
jax: 0.10.0
libtpu: 0.0.40
codegen_flags: <defaults>
</compile_context>

<pallas_src>
import numpy as np
import jax
import jax.numpy as jnp
from jax import lax
from jax.experimental import pallas as pl
from jax.experimental.pallas import tpu as pltpu

K = 15
N_INTERPOLATE = 11
STEP_SIZE = 0.3
THR_JUMP_ITER = 50
THR_SSIM = 0.6

C, H, W = 3, 16, 16
CHW = H * W                        # 256 per channel (2 x 128 lanes)
D = C * CHW                        # 768 = 6 x 128 lanes (lane dense)
NUM_CLASSES = 10
CLS_PAD = 128                      # victim head padded to one full vreg of lanes
HV, WV = H - 4, W - 4              # valid 5x5 window output (12 x 12)
S_PER_C = HV * WV                  # 144 per-channel SSIM map
S_TOTAL = C * S_PER_C              # 432
J_PAD = 16                         # fixed recover-kernel jump count (K=15 -> 16)
_SSIM_C1 = 0.01 ** 2
_SSIM_C2 = 0.03 ** 2
_T_VALUES = [float(t) for t in np.linspace(0.0, 1.0, N_INTERPOLATE)]


def _round_up(x, m):
    return (x + m - 1) // m * m


# ----------------------- per-channel constant blocks -------------------------

def _build_blur_block():
    # depthwise 3x3 box blur with zero padding, single per-channel (256, 256)
    # block (the full matrix is block-diagonal with 3 identical blocks).
    m = np.zeros((CHW, CHW), np.float32)
    for h in range(H):
        for w in range(W):
            src = h * W + w
            for i in range(max(0, h - 1), min(H, h + 2)):
                for j in range(max(0, w - 1), min(W, w + 2)):
                    m[src, i * W + j] = 1.0 / 9.0
    return m


def _build_gauss_block():
    # depthwise valid 5x5 gaussian window (sigma=1.5), per-channel (256, 144).
    g = np.exp(-0.5 * ((np.arange(5) - 2.0) / 1.5) ** 2)
    g = g / g.sum()
    win = np.outer(g, g)
    m = np.zeros((CHW, S_PER_C), np.float32)
    for i in range(HV):
        for j in range(WV):
            dst = i * WV + j
            for dh in range(5):
                for dw in range(5):
                    m[(i + dh) * W + (j + dw), dst] = float(win[dh, dw])
    return m


# --------------------------- in-kernel layout helpers -------------------------

def _chan_rows(x):
    # (rows, 768) -> (3*rows, 256) channel-major; lane slices at multiples of 128.
    return jnp.concatenate([x[:, c * CHW:(c + 1) * CHW] for c in range(C)], axis=0)


def _chan_cat(xc, rows):
    # (3*rows, 256) channel-major -> (rows, 768)
    return jnp.concatenate([xc[c * rows:(c + 1) * rows] for c in range(C)], axis=1)


def _rep_rows(x3, rows):
    # (3, L) -> (3*rows, L): each channel row repeated `rows` times (channel-major).
    return jnp.concatenate(
        [jnp.broadcast_to(x3[c:c + 1, :], (rows, x3.shape[1])) for c in range(C)],
        axis=0)


# ------------------------- fused "analyze" kernel ----------------------------

def _make_analyze_kernel(n, tm):
    cnt = min(3 * n, K)            # rows in inputs[-K:]
    thr_a1 = 3 * n - K             # first adv copy enters the last-K window
    thr_a2 = 2 * n - K             # second adv copy
    thr_d = n - K                  # dip rows

    def kernel(adv_ref, ref_ref, blur_ref, gmat_ref, w_ref, b_ref,
               dip_ref, ia_ref, id_ref, fb_ref):
        i = pl.program_id(0)
        adv = adv_ref[...]                                     # (tm, 768) f32
        ref = ref_ref[...]                                     # (1, 768)  f32
        blur = blur_ref[...]                                   # (256, 256) bf16
        gmat = gmat_ref[...]                                   # (256, 144) f32
        w = w_ref[...]                                         # (768, 128) bf16
        b = b_ref[...]                                         # (1, 128)  f32

        # DIP stand-in: depthwise 3x3 zero-padded box blur, ONE bf16 MXU matmul
        adv_c = _chan_rows(adv)                                # (3tm, 256)
        dip_c = jnp.dot(adv_c.astype(jnp.bfloat16), blur,
                        preferred_element_type=jnp.float32)    # (3tm, 256) f32
        dip = _chan_cat(dip_c, tm)                             # (tm, 768)
        dip_ref[...] = dip

        # victim stand-in (linear head): [adv; dip] share one RHS pass
        xcls = jnp.concatenate([adv, dip], axis=0)             # (2tm, 768)
        logits = jnp.dot(xcls.astype(jnp.bfloat16), w,
                         preferred_element_type=jnp.float32) + b
        col2 = lax.broadcasted_iota(jnp.int32, (2 * tm, CLS_PAD), 1)
        colf2 = col2.astype(jnp.float32)
        logits = jnp.where(col2 < NUM_CLASSES, logits, -1e30)
        mx = jnp.max(logits, axis=1, keepdims=True)
        pred = jnp.min(jnp.where(logits >= mx, colf2, 1e30), axis=1,
                       keepdims=True)                          # (2tm, 1) argmax

        # SSIM vs inputs[1]: reference stats once, all filtering batched in ONE
        # gmat matmul ([x, x*x, x*ref] for adv and dip -> 18*tm LHS rows).
        ref_c = _chan_rows(ref)                                # (3, 256)
        rstack = jnp.concatenate([ref_c, ref_c * ref_c, ref_c[0:2]], axis=0)  # (8,256)
        rstat = jnp.dot(rstack, gmat, preferred_element_type=jnp.float32)     # (8,144)
        mu_y = rstat[0:3]
        var_y = rstat[3:6] - mu_y * mu_y
        ref_b = _rep_rows(ref_c, tm)                           # (3tm, 256)
        mu_y_b = _rep_rows(mu_y, tm)                           # (3tm, 144)
        var_y_b = _rep_rows(var_y, tm)

        def ssim_lhs(xc):                                      # (3tm,256)->(9tm,256)
            return jnp.concatenate([xc, xc * xc, xc * ref_b], axis=0)

        big = jnp.concatenate([ssim_lhs(adv_c), ssim_lhs(dip_c)], axis=0)  # (18tm,256)
        stat = jnp.dot(big, gmat, preferred_element_type=jnp.float32)      # (18tm,144)

        def ssim_of(off):                                      # per-group SSIM -> (tm,1)
            mu_x = stat[off:off + 3 * tm]
            var_x = stat[off + 3 * tm:off + 6 * tm] - mu_x * mu_x
            cov = stat[off + 6 * tm:off + 9 * tm] - mu_x * mu_y_b
            num = (2.0 * mu_x * mu_y_b + _SSIM_C1) * (2.0 * cov + _SSIM_C2)
            den = ((mu_x * mu_x + mu_y_b * mu_y_b + _SSIM_C1)
                   * (var_x + var_y_b + _SSIM_C2))
            s_rc = jnp.sum(num / den, axis=1, keepdims=True)   # (3tm, 1)
            return (s_rc[0:tm] + s_rc[tm:2 * tm]
                    + s_rc[2 * tm:3 * tm]) * (1.0 / S_TOTAL)

        ssim_adv = ssim_of(0)
        ssim_dip = ssim_of(9 * tm)

        # pack (argmax, ssim) lane-dense: lane 0 = pred, lane 1 = ssim
        col1 = lax.broadcasted_iota(jnp.int32, (tm, CLS_PAD), 1)

        def pack(p, s):
            return jnp.where(col1 == 1, s, jnp.where(col1 == 0, p, 0.0))

        ia_ref[...] = pack(pred[0:tm], ssim_adv)               # unique adv rows
        id_ref[...] = pack(pred[tm:2 * tm], ssim_dip)          # unique dip rows

        # fallback inputs[-K:].mean(0): masked partial sum for this tile
        # (row masks instead of sublane-misaligned slices; parallel-safe output)
        rowg = lax.broadcasted_iota(jnp.int32, (tm, D), 0) + i * tm
        in_rng = rowg < n
        w_a = (jnp.where((rowg >= thr_a1) & in_rng, 1.0, 0.0)
               + jnp.where((rowg >= thr_a2) & in_rng, 1.0, 0.0))
        w_d = jnp.where((rowg >= thr_d) & in_rng, 1.0, 0.0)
        part = (jnp.sum(adv * w_a, axis=0, keepdims=True)
                + jnp.sum(dip * w_d, axis=0, keepdims=True)) * (1.0 / cnt)
        rsel = lax.broadcasted_iota(jnp.int32, (8, D), 0)
        fb_ref[...] = jnp.where(rsel == 0, jnp.broadcast_to(part, (8, D)), 0.0)

    return kernel


@jax.jit
def _analyze(adv_flat, blur_blk, gauss_blk, w_pad, b_pad):
    n = adv_flat.shape[0]
    ref_row = 1 if n >= 2 else 0
    tm = min(64, _round_up(n, 8))          # bounded VMEM for any n
    n_pad = _round_up(n, tm)
    g = n_pad // tm
    adv_p = adv_flat if n_pad == n else jnp.pad(adv_flat, ((0, n_pad - n), (0, 0)))
    ref = adv_flat[ref_row:ref_row + 1]

    dip, ia, idp, fbp = pl.pallas_call(
        _make_analyze_kernel(n, tm),
        out_shape=(jax.ShapeDtypeStruct((n_pad, D), jnp.float32),        # dip_flat
                   jax.ShapeDtypeStruct((n_pad, CLS_PAD), jnp.float32),  # adv info
                   jax.ShapeDtypeStruct((n_pad, CLS_PAD), jnp.float32),  # dip info
                   jax.ShapeDtypeStruct((8 * g, D), jnp.float32)),       # fb partials
        grid=(g,),
        in_specs=[pl.BlockSpec((tm, D), lambda i: (i, 0)),
                  pl.BlockSpec((1, D), lambda i: (0, 0)),
                  pl.BlockSpec((CHW, CHW), lambda i: (0, 0)),
                  pl.BlockSpec((CHW, S_PER_C), lambda i: (0, 0)),
                  pl.BlockSpec((D, CLS_PAD), lambda i: (0, 0)),
                  pl.BlockSpec((1, CLS_PAD), lambda i: (0, 0))],
        out_specs=(pl.BlockSpec((tm, D), lambda i: (i, 0)),
                   pl.BlockSpec((tm, CLS_PAD), lambda i: (i, 0)),
                   pl.BlockSpec((tm, CLS_PAD), lambda i: (i, 0)),
                   pl.BlockSpec((8, D), lambda i: (i, 0))),
        compiler_params=pltpu.CompilerParams(
            dimension_semantics=("parallel",)),
    )(adv_p, ref, blur_blk, gauss_blk, w_pad, b_pad)

    # tiny XLA epilogue: shrink the D2H payload to (2n, 2) and finish the mean
    info_small = jnp.concatenate([ia[:n, :2], idp[:n, :2]], axis=0)
    fb_mean = jnp.sum(fbp, axis=0, keepdims=True)
    return dip, info_small, fb_mean


# ------------------------- fused "recover" kernel ----------------------------

def _recover_kernel(l_ref, r_ref, ref_ref, cl_ref, cr_ref, vld_ref,
                    w_ref, b_ref, o_ref):
    imgs_l = l_ref[...]                                        # (J_PAD, 768)
    delta = r_ref[...] - imgs_l
    ref = ref_ref[...]                                         # (1, 768)
    w = w_ref[...]                                             # (768, 128) bf16
    b = b_ref[...]

    # 11-point interpolation hoisted into ONE victim matmul (one RHS pass)
    x_all = jnp.concatenate([imgs_l + t * delta for t in _T_VALUES], axis=0)
    logits = jnp.dot(x_all.astype(jnp.bfloat16), w,
                     preferred_element_type=jnp.float32) + b   # (11*J_PAD, 128)
    col_a = lax.broadcasted_iota(jnp.int32, (N_INTERPOLATE * J_PAD, CLS_PAD), 1)
    logits = jnp.where(col_a < NUM_CLASSES, logits, -1e30)
    mx = jnp.max(logits, axis=1, keepdims=True)
    e = jnp.where(col_a < NUM_CLASSES, jnp.exp(logits - mx), 0.0)
    sum_e = jnp.sum(e, axis=1, keepdims=True)                  # (11*J_PAD, 1)

    col_j = lax.broadcasted_iota(jnp.int32, (J_PAD, CLS_PAD), 1).astype(jnp.float32)
    sel_l = col_j == cl_ref[...]                               # (J_PAD, 128) one-hot
    sel_r = col_j == cr_ref[...]

    # per-jump argmin over t of |p_l - p_r| (unnormalized probs x EUP reciprocal)
    best = imgs_l
    dmin = jnp.full((J_PAD, 1), 1e30, jnp.float32)
    for ti in range(N_INTERPOLATE):
        lo = ti * J_PAD
        e_t = e[lo:lo + J_PAD]
        p_l = jnp.sum(jnp.where(sel_l, e_t, 0.0), axis=1, keepdims=True)
        p_r = jnp.sum(jnp.where(sel_r, e_t, 0.0), axis=1, keepdims=True)
        d_t = jnp.abs(p_l - p_r) * pl.reciprocal(sum_e[lo:lo + J_PAD], approx=True)
        better = d_t < dmin                                    # first t wins ties
        dmin = jnp.where(better, d_t, dmin)
        best = jnp.where(better, x_all[lo:lo + J_PAD], best)

    rec = best - STEP_SIZE * (ref - best)                      # bd - step*(inputs[1]-bd)
    vmask = vld_ref[...]                                       # (J_PAD, 1): 1 = real jump
    denom = jnp.sum(vmask, axis=0, keepdims=True)              # (1, 1)
    o_ref[...] = jnp.sum(rec * vmask, axis=0, keepdims=True) / denom


@jax.jit
def _recover(imgs_l, imgs_r, ref_flat, cls_l, cls_r, valid, w_pad, b_pad):
    return pl.pallas_call(
        _recover_kernel,
        out_shape=jax.ShapeDtypeStruct((1, D), jnp.float32),
        grid=(1,),
        in_specs=[pl.BlockSpec((J_PAD, D), lambda i: (0, 0)),
                  pl.BlockSpec((J_PAD, D), lambda i: (0, 0)),
                  pl.BlockSpec((1, D), lambda i: (0, 0)),
                  pl.BlockSpec((J_PAD, 1), lambda i: (0, 0)),
                  pl.BlockSpec((J_PAD, 1), lambda i: (0, 0)),
                  pl.BlockSpec((J_PAD, 1), lambda i: (0, 0)),
                  pl.BlockSpec((D, CLS_PAD), lambda i: (0, 0)),
                  pl.BlockSpec((1, CLS_PAD), lambda i: (0, 0))],
        out_specs=pl.BlockSpec((1, D), lambda i: (0, 0)),
        compiler_params=pltpu.CompilerParams(dimension_semantics=("arbitrary",)),
    )(imgs_l, imgs_r, ref_flat, cls_l, cls_r, valid, w_pad, b_pad)


def _gather_stacked(adv_flat, dip_flat, stacked_idx, n):
    # inputs = [adv, adv, dip]; decompose stacked indices on host, gather on device
    # (avoids materializing the (3n, 768) stack in HBM).
    stacked_idx = np.asarray(stacked_idx, np.int64)
    is_dip = stacked_idx >= 2 * n
    adv_rows = np.where(is_dip, 0, stacked_idx % n)
    dip_rows = np.where(is_dip, stacked_idx - 2 * n, 0)
    a = jnp.take(adv_flat, jnp.asarray(adv_rows), axis=0)
    d = jnp.take(dip_flat, jnp.asarray(dip_rows), axis=0)
    return jnp.where(jnp.asarray(is_dip)[:, None], d, a)


# ------------------------------- Defender ------------------------------------

class Defender:
    """Pallas/JAX port of the reference Defender module."""

    def __init__(self, victim_w, victim_b):
        # victim head padded to 128 lanes; bf16 weights, f32 MXU accumulation
        w = jnp.zeros((D, CLS_PAD), jnp.float32).at[:, :NUM_CLASSES].set(victim_w)
        self.w_pad = w.astype(jnp.bfloat16)
        self.b_pad = jnp.zeros((1, CLS_PAD), jnp.float32).at[0, :NUM_CLASSES].set(victim_b)
        # per-channel constant blocks (block-diagonal structure of depthwise filters)
        self.blur_blk = jnp.asarray(_build_blur_block()).astype(jnp.bfloat16)
        # SSIM gaussian kept f32: hard 0.6 threshold + var cancellation sensitivity;
        # only 144 KiB after the block-diagonal shrink so the DMA saving is moot.
        self.gauss_blk = jnp.asarray(_build_gauss_block())
        self.cnt = 0

    def forward(self, adv_images):
        self.cnt += 1
        # (reference prints '# DIP Optimization: {cnt}'; omitted to keep stdout clean)
        n = adv_images.shape[0]
        adv_flat = adv_images.reshape(n, D)

        # ONE fused Pallas kernel: blur + victim argmax + SSIM + fallback mean
        dip_flat, info_small, fb_mean = _analyze(adv_flat, self.blur_blk,
                                                 self.gauss_blk, self.w_pad,
                                                 self.b_pad)

        # the ONLY blocking device->host transfer: a (2n, 2) [argmax, ssim] table
        info_h = np.asarray(info_small)
        preds_u = info_h[:, 0].astype(np.int64)       # unique rows: [adv(0:n), dip(n:2n)]
        ssims_u = info_h[:, 1]
        # inputs = [adv, adv, dip] -> duplicate rows share preds/ssims exactly
        preds = np.concatenate([preds_u[:n], preds_u[:n], preds_u[n:2 * n]])
        ssims = np.concatenate([ssims_u[:n], ssims_u[:n], ssims_u[n:2 * n]])

        # ---- jump detection (variable-length selection; host side, tiny) ----
        p2 = preds[2:]
        diff = p2[1:] - p2[:-1]                       # torch_diff(argmax(output[2:]))
        nz = np.nonzero(diff)[0]
        indices = nz[-K:] + 1
        indices_stripped = indices[ssims[2:][indices] > THR_SSIM] + 2
        indices_stripped = indices_stripped[indices_stripped > THR_JUMP_ITER]

        if indices_stripped.size == 0:
            return fb_mean.reshape(1, C, H, W)        # inputs[-K:].mean(0), fused

        cls_l = preds[indices_stripped - 1]
        cls_r = preds[indices_stripped]
        assert np.all(cls_l != cls_r)
        ref_row = 1 if n >= 2 else 0
        rec = self._recover_padded(adv_flat, dip_flat,
                                   adv_flat[ref_row:ref_row + 1], n,
                                   indices_stripped, cls_l, cls_r)
        return rec.reshape(1, C, H, W)

    def _recover_padded(self, adv_flat, dip_flat, ref_flat, n,
                        indices_stripped, cls_l, cls_r):
        # pad to a fixed J_PAD so a single recover kernel serves every jump count
        j = int(indices_stripped.size)
        pad = J_PAD - j
        idx_l = np.concatenate([np.asarray(indices_stripped, np.int64) - 1,
                                np.zeros(pad, np.int64)])
        idx_r = np.concatenate([np.asarray(indices_stripped, np.int64),
                                np.zeros(pad, np.int64)])
        cl = np.concatenate([np.asarray(cls_l, np.float32), -np.ones(pad, np.float32)])
        cr = np.concatenate([np.asarray(cls_r, np.float32), -np.ones(pad, np.float32)])
        valid = np.concatenate([np.ones(j, np.float32), np.zeros(pad, np.float32)])
        imgs_l = _gather_stacked(adv_flat, dip_flat, idx_l, n)
        imgs_r = _gather_stacked(adv_flat, dip_flat, idx_r, n)
        return _recover(imgs_l, imgs_r, ref_flat,
                        jnp.asarray(cl.reshape(-1, 1)),
                        jnp.asarray(cr.reshape(-1, 1)),
                        jnp.asarray(valid.reshape(-1, 1)),
                        self.w_pad, self.b_pad)


# --------------------------------- driver -------------------------------------

if __name__ == "__main__":
    key = jax.random.PRNGKey(0)
    k1, k2 = jax.random.split(key)
    batch = 8
    adv_images = jax.random.uniform(k1, (batch, C, H, W), jnp.float32)
    # deterministic synthetic victim parameters (linear classifier over flat image)
    victim_w = jax.random.normal(k2, (D, NUM_CLASSES), jnp.float32) * 0.05
    victim_b = jnp.zeros((NUM_CLASSES,), jnp.float32)

    defender = Defender(victim_w, victim_b)
    rec = defender.forward(adv_images)
    rec = jax.block_until_ready(rec)
    assert rec.shape == (1, C, H, W)
    assert bool(jnp.all(jnp.isfinite(rec)))

    # With 3*batch = 24 < THR_JUMP_ITER the reference always takes the fallback
    # branch; smoke-test the (otherwise cold) recover kernel directly so both
    # Pallas kernels compile and run on TPU.
    adv_flat = adv_images.reshape(batch, D)
    rec2 = defender._recover_padded(
        adv_flat, adv_flat, adv_flat[1:2], batch,
        np.array([3, 10, 20], np.int64),
        np.array([0, 1, 2], np.int64),
        np.array([1, 2, 3], np.int64))
    rec2 = jax.block_until_ready(rec2)
    assert rec2.shape == (1, D)
    assert bool(jnp.all(jnp.isfinite(rec2)))
    print("KERNEL_OK")
</pallas_src>

<mosaic_0001>
module attributes {stable_mosaic.version = 11 : i64} {
  func.func @kernel(%arg0: i32, %arg1: memref<8x768xf32, #tpu.memory_space<vmem>>, %arg2: memref<1x768xf32, #tpu.memory_space<vmem>>, %arg3: memref<256x256xbf16, #tpu.memory_space<vmem>>, %arg4: memref<256x144xf32, #tpu.memory_space<vmem>>, %arg5: memref<768x128xbf16, #tpu.memory_space<vmem>>, %arg6: memref<1x128xf32, #tpu.memory_space<vmem>>, %arg7: memref<8x768xf32, #tpu.memory_space<vmem>>, %arg8: memref<8x128xf32, #tpu.memory_space<vmem>>, %arg9: memref<8x128xf32, #tpu.memory_space<vmem>>, %arg10: memref<8x768xf32, #tpu.memory_space<vmem>>) attributes {dimension_semantics = [#tpu.dimension_semantics<parallel>], iteration_bounds = array<i64: 1>, scalar_prefetch = 0 : i64, scratch_operands = 0 : i64, tpu.core_type = #tpu.core_type<tc>, window_params = [{transform_indices = @transform_0, window_bounds = array<i64: 8, 768>}, {pipeline_mode = #tpu.pipeline_mode<synchronous>, transform_indices = @transform_1, window_bounds = array<i64: 1, 768>}, {pipeline_mode = #tpu.pipeline_mode<synchronous>, transform_indices = @transform_2, window_bounds = array<i64: 256, 256>}, {pipeline_mode = #tpu.pipeline_mode<synchronous>, transform_indices = @transform_3, window_bounds = array<i64: 256, 144>}, {pipeline_mode = #tpu.pipeline_mode<synchronous>, transform_indices = @transform_4, window_bounds = array<i64: 768, 128>}, {pipeline_mode = #tpu.pipeline_mode<synchronous>, transform_indices = @transform_5, window_bounds = array<i64: 1, 128>}, {transform_indices = @transform_6, window_bounds = array<i64: 8, 768>}, {transform_indices = @transform_7, window_bounds = array<i64: 8, 128>}, {transform_indices = @transform_8, window_bounds = array<i64: 8, 128>}, {transform_indices = @transform_9, window_bounds = array<i64: 8, 768>}]} {
    %c0 = arith.constant 0 : index
    %c0_0 = arith.constant 0 : index
    %0 = vector.load %arg1[%c0, %c0_0] : memref<8x768xf32, #tpu.memory_space<vmem>>, vector<8x768xf32>
    %c0_1 = arith.constant 0 : index
    %c0_2 = arith.constant 0 : index
    %1 = vector.load %arg2[%c0_1, %c0_2] : memref<1x768xf32, #tpu.memory_space<vmem>>, vector<1x768xf32>
    %c0_3 = arith.constant 0 : index
    %c0_4 = arith.constant 0 : index
    %2 = vector.load %arg3[%c0_3, %c0_4] : memref<256x256xbf16, #tpu.memory_space<vmem>>, vector<256x256xbf16>
    %c0_5 = arith.constant 0 : index
    %c0_6 = arith.constant 0 : index
    %3 = vector.load %arg4[%c0_5, %c0_6] : memref<256x144xf32, #tpu.memory_space<vmem>>, vector<256x144xf32>
    %c0_7 = arith.constant 0 : index
    %c0_8 = arith.constant 0 : index
    %4 = vector.load %arg5[%c0_7, %c0_8] : memref<768x128xbf16, #tpu.memory_space<vmem>>, vector<768x128xbf16>
    %c0_9 = arith.constant 0 : index
    %c0_10 = arith.constant 0 : index
    %5 = vector.load %arg6[%c0_9, %c0_10] : memref<1x128xf32, #tpu.memory_space<vmem>>, vector<1x128xf32>
    %6 = vector.extract_strided_slice %0 {offsets = [0, 0], sizes = [8, 256], strides = [1, 1]} : vector<8x768xf32> to vector<8x256xf32>
    %7 = vector.extract_strided_slice %0 {offsets = [0, 256], sizes = [8, 256], strides = [1, 1]} : vector<8x768xf32> to vector<8x256xf32>
    %8 = vector.extract_strided_slice %0 {offsets = [0, 512], sizes = [8, 256], strides = [1, 1]} : vector<8x768xf32> to vector<8x256xf32>
    %9 = tpu.concatenate %6, %7, %8 in 0 : vector<8x256xf32>, vector<8x256xf32>, vector<8x256xf32> -> vector<24x256xf32>
    %10 = arith.truncf %9 : vector<24x256xf32> to vector<24x256xbf16>
    %cst = arith.constant dense<0.000000e+00> : vector<24x256xf32>
    %11 = tpu.matmul %10, %2, %cst {dimension_numbers = #tpu.dot_dimension_numbers<[1], [0], [0], [1], [0, 0, 1, 1], [], []>} : vector<24x256xbf16>, vector<256x256xbf16>, vector<24x256xf32> -> vector<24x256xf32>
    %12 = vector.extract_strided_slice %11 {offsets = [0, 0], sizes = [8, 256], strides = [1, 1]} : vector<24x256xf32> to vector<8x256xf32>
    %13 = vector.extract_strided_slice %11 {offsets = [8, 0], sizes = [8, 256], strides = [1, 1]} : vector<24x256xf32> to vector<8x256xf32>
    %14 = vector.extract_strided_slice %11 {offsets = [16, 0], sizes = [8, 256], strides = [1, 1]} : vector<24x256xf32> to vector<8x256xf32>
    %15 = tpu.concatenate %12, %13, %14 in 1 : vector<8x256xf32>, vector<8x256xf32>, vector<8x256xf32> -> vector<8x768xf32>
    %c0_11 = arith.constant 0 : index
    %c0_12 = arith.constant 0 : index
    %16 = vector.load %arg7[%c0_11, %c0_12] : memref<8x768xf32, #tpu.memory_space<vmem>>, vector<8x768xf32>
    tpu.vector_store %arg7[%c0_11, %c0_12], %15 {strides = array<i32>} : memref<8x768xf32, #tpu.memory_space<vmem>>, vector<8x768xf32>,
    %17 = tpu.concatenate %0, %15 in 0 : vector<8x768xf32>, vector<8x768xf32> -> vector<16x768xf32>
    %18 = arith.truncf %17 : vector<16x768xf32> to vector<16x768xbf16>
    %cst_13 = arith.constant dense<0.000000e+00> : vector<16x128xf32>
    %19 = tpu.matmul %18, %4, %cst_13 {dimension_numbers = #tpu.dot_dimension_numbers<[1], [0], [0], [1], [0, 0, 1, 1], [], []>} : vector<16x768xbf16>, vector<768x128xbf16>, vector<16x128xf32> -> vector<16x128xf32>
    %20 = vector.broadcast %5 : vector<1x128xf32> to vector<16x128xf32>
    %21 = arith.addf %19, %20 : vector<16x128xf32>
    %22 = tpu.iota {dimensions = array<i32: 1>} : vector<16x128xi32>
    %23 = arith.sitofp %22 : vector<16x128xi32> to vector<16x128xf32>
    %c10_i32 = arith.constant 10 : i32
    %24 = vector.broadcast %c10_i32 : i32 to vector<16x128xi32>
    %25 = arith.cmpi slt, %22, %24 : vector<16x128xi32>
    %cst_14 = arith.constant -1.000000e+30 : f32
    %26 = vector.broadcast %cst_14 : f32 to vector<16x128xf32>
    %27 = arith.select %25, %21, %26 : vector<16x128xi1>, vector<16x128xf32>
    %cst_15 = arith.constant dense<0xFF800000> : vector<16xf32>
    %28 = vector.multi_reduction <maximumf>, %27, %cst_15 [1] : vector<16x128xf32> to vector<16xf32>
    %29 = vector.shape_cast %28 : vector<16xf32> to vector<16x1xf32>
    %30 = vector.broadcast %29 : vector<16x1xf32> to vector<16x128xf32>
    %31 = arith.cmpf oge, %27, %30 : vector<16x128xf32>
    %cst_16 = arith.constant 1.000000e+30 : f32
    %32 = vector.broadcast %cst_16 : f32 to vector<16x128xf32>
    %33 = arith.select %31, %23, %32 : vector<16x128xi1>, vector<16x128xf32>
    %cst_17 = arith.constant dense<0x7F800000> : vector<16xf32>
    %34 = vector.multi_reduction <minimumf>, %33, %cst_17 [1] : vector<16x128xf32> to vector<16xf32>
    %35 = vector.shape_cast %34 : vector<16xf32> to vector<16x1xf32>
    %36 = vector.extract_strided_slice %1 {offsets = [0, 0], sizes = [1, 256], strides = [1, 1]} : vector<1x768xf32> to vector<1x256xf32>
    %37 = vector.extract_strided_slice %1 {offsets = [0, 256], sizes = [1, 256], strides = [1, 1]} : vector<1x768xf32> to vector<1x256xf32>
    %38 = vector.extract_strided_slice %1 {offsets = [0, 512], sizes = [1, 256], strides = [1, 1]} : vector<1x768xf32> to vector<1x256xf32>
    %39 = tpu.concatenate %36, %37, %38 in 0 : vector<1x256xf32>, vector<1x256xf32>, vector<1x256xf32> -> vector<3x256xf32>
    %40 = arith.mulf %39, %39 : vector<3x256xf32>
    %41 = vector.extract_strided_slice %39 {offsets = [0, 0], sizes = [2, 256], strides = [1, 1]} : vector<3x256xf32> to vector<2x256xf32>
    %42 = tpu.concatenate %39, %40, %41 in 0 : vector<3x256xf32>, vector<3x256xf32>, vector<2x256xf32> -> vector<8x256xf32>
    %cst_18 = arith.constant dense<0.000000e+00> : vector<8x144xf32>
    %43 = tpu.matmul %42, %3, %cst_18 {dimension_numbers = #tpu.dot_dimension_numbers<[1], [0], [0], [1], [0, 0, 1, 1], [], []>} : vector<8x256xf32>, vector<256x144xf32>, vector<8x144xf32> -> vector<8x144xf32>
    %44 = vector.extract_strided_slice %43 {offsets = [0, 0], sizes = [3, 144], strides = [1, 1]} : vector<8x144xf32> to vector<3x144xf32>
    %45 = vector.extract_strided_slice %43 {offsets = [3, 0], sizes = [3, 144], strides = [1, 1]} : vector<8x144xf32> to vector<3x144xf32>
    %46 = arith.mulf %44, %44 : vector<3x144xf32>
    %47 = arith.subf %45, %46 : vector<3x144xf32>
    %48 = vector.extract_strided_slice %39 {offsets = [0, 0], sizes = [1, 256], strides = [1, 1]} : vector<3x256xf32> to vector<1x256xf32>
    %49 = vector.shape_cast %48 : vector<1x256xf32> to vector<1x256xf32>
    %50 = vector.broadcast %49 : vector<1x256xf32> to vector<8x256xf32>
    %51 = vector.extract_strided_slice %39 {offsets = [1, 0], sizes = [1, 256], strides = [1, 1]} : vector<3x256xf32> to vector<1x256xf32>
    %52 = vector.shape_cast %51 : vector<1x256xf32> to vector<1x256xf32>
    %53 = vector.broadcast %52 : vector<1x256xf32> to vector<8x256xf32>
    %54 = vector.extract_strided_slice %39 {offsets = [2, 0], sizes = [1, 256], strides = [1, 1]} : vector<3x256xf32> to vector<1x256xf32>
    %55 = vector.shape_cast %54 : vector<1x256xf32> to vector<1x256xf32>
    %56 = vector.broadcast %55 : vector<1x256xf32> to vector<8x256xf32>
    %57 = tpu.concatenate %50, %53, %56 in 0 : vector<8x256xf32>, vector<8x256xf32>, vector<8x256xf32> -> vector<24x256xf32>
    %58 = vector.extract_strided_slice %44 {offsets = [0, 0], sizes = [1, 144], strides = [1, 1]} : vector<3x144xf32> to vector<1x144xf32>
    %59 = vector.shape_cast %58 : vector<1x144xf32> to vector<1x144xf32>
    %60 = vector.broadcast %59 : vector<1x144xf32> to vector<8x144xf32>
    %61 = vector.extract_strided_slice %44 {offsets = [1, 0], sizes = [1, 144], strides = [1, 1]} : vector<3x144xf32> to vector<1x144xf32>
    %62 = vector.shape_cast %61 : vector<1x144xf32> to vector<1x144xf32>
    %63 = vector.broadcast %62 : vector<1x144xf32> to vector<8x144xf32>
    %64 = vector.extract_strided_slice %44 {offsets = [2, 0], sizes = [1, 144], strides = [1, 1]} : vector<3x144xf32> to vector<1x144xf32>
    %65 = vector.shape_cast %64 : vector<1x144xf32> to vector<1x144xf32>
    %66 = vector.broadcast %65 : vector<1x144xf32> to vector<8x144xf32>
    %67 = tpu.concatenate %60, %63, %66 in 0 : vector<8x144xf32>, vector<8x144xf32>, vector<8x144xf32> -> vector<24x144xf32>
    %68 = vector.extract_strided_slice %47 {offsets = [0, 0], sizes = [1, 144], strides = [1, 1]} : vector<3x144xf32> to vector<1x144xf32>
    %69 = vector.shape_cast %68 : vector<1x144xf32> to vector<1x144xf32>
    %70 = vector.broadcast %69 : vector<1x144xf32> to vector<8x144xf32>
    %71 = vector.extract_strided_slice %47 {offsets = [1, 0], sizes = [1, 144], strides = [1, 1]} : vector<3x144xf32> to vector<1x144xf32>
    %72 = vector.shape_cast %71 : vector<1x144xf32> to vector<1x144xf32>
    %73 = vector.broadcast %72 : vector<1x144xf32> to vector<8x144xf32>
    %74 = vector.extract_strided_slice %47 {offsets = [2, 0], sizes = [1, 144], strides = [1, 1]} : vector<3x144xf32> to vector<1x144xf32>
    %75 = vector.shape_cast %74 : vector<1x144xf32> to vector<1x144xf32>
    %76 = vector.broadcast %75 : vector<1x144xf32> to vector<8x144xf32>
    %77 = tpu.concatenate %70, %73, %76 in 0 : vector<8x144xf32>, vector<8x144xf32>, vector<8x144xf32> -> vector<24x144xf32>
    %78 = arith.mulf %9, %9 : vector<24x256xf32>
    %79 = arith.mulf %9, %57 : vector<24x256xf32>
    %80 = tpu.concatenate %9, %78, %79 in 0 : vector<24x256xf32>, vector<24x256xf32>, vector<24x256xf32> -> vector<72x256xf32>
    %81 = arith.mulf %11, %11 : vector<24x256xf32>
    %82 = arith.mulf %11, %57 : vector<24x256xf32>
    %83 = tpu.concatenate %11, %81, %82 in 0 : vector<24x256xf32>, vector<24x256xf32>, vector<24x256xf32> -> vector<72x256xf32>
    %84 = tpu.concatenate %80, %83 in 0 : vector<72x256xf32>, vector<72x256xf32> -> vector<144x256xf32>
    %cst_19 = arith.constant dense<0.000000e+00> : vector<144x144xf32>
    %85 = tpu.matmul %84, %3, %cst_19 {dimension_numbers = #tpu.dot_dimension_numbers<[1], [0], [0], [1], [0, 0, 1, 1], [], []>} : vector<144x256xf32>, vector<256x144xf32>, vector<144x144xf32> -> vector<144x144xf32>
    %86 = vector.extract_strided_slice %85 {offsets = [0, 0], sizes = [24, 144], strides = [1, 1]} : vector<144x144xf32> to vector<24x144xf32>
    %87 = vector.extract_strided_slice %85 {offsets = [24, 0], sizes = [24, 144], strides = [1, 1]} : vector<144x144xf32> to vector<24x144xf32>
    %88 = arith.mulf %86, %86 : vector<24x144xf32>
    %89 = arith.subf %87, %88 : vector<24x144xf32>
    %90 = vector.extract_strided_slice %85 {offsets = [48, 0], sizes = [24, 144], strides = [1, 1]} : vector<144x144xf32> to vector<24x144xf32>
    %91 = arith.mulf %86, %67 : vector<24x144xf32>
    %92 = arith.subf %90, %91 : vector<24x144xf32>
    %cst_20 = arith.constant 2.000000e+00 : f32
    %93 = vector.broadcast %cst_20 : f32 to vector<24x144xf32>
    %94 = arith.mulf %93, %86 : vector<24x144xf32>
    %95 = arith.mulf %94, %67 : vector<24x144xf32>
    %cst_21 = arith.constant 9.99999974E-5 : f32
    %96 = vector.broadcast %cst_21 : f32 to vector<24x144xf32>
    %97 = arith.addf %95, %96 : vector<24x144xf32>
    %cst_22 = arith.constant 2.000000e+00 : f32
    %98 = vector.broadcast %cst_22 : f32 to vector<24x144xf32>
    %99 = arith.mulf %98, %92 : vector<24x144xf32>
    %cst_23 = arith.constant 8.99999984E-4 : f32
    %100 = vector.broadcast %cst_23 : f32 to vector<24x144xf32>
    %101 = arith.addf %99, %100 : vector<24x144xf32>
    %102 = arith.mulf %97, %101 : vector<24x144xf32>
    %103 = arith.mulf %86, %86 : vector<24x144xf32>
    %104 = arith.mulf %67, %67 : vector<24x144xf32>
    %105 = arith.addf %103, %104 : vector<24x144xf32>
    %cst_24 = arith.constant 9.99999974E-5 : f32
    %106 = vector.broadcast %cst_24 : f32 to vector<24x144xf32>
    %107 = arith.addf %105, %106 : vector<24x144xf32>
    %108 = arith.addf %89, %77 : vector<24x144xf32>
    %cst_25 = arith.constant 8.99999984E-4 : f32
    %109 = vector.broadcast %cst_25 : f32 to vector<24x144xf32>
    %110 = arith.addf %108, %109 : vector<24x144xf32>
    %111 = arith.mulf %107, %110 : vector<24x144xf32>
    %112 = arith.divf %102, %111 : vector<24x144xf32>
    %cst_26 = arith.constant dense<0.000000e+00> : vector<24xf32>
    %113 = vector.multi_reduction <add>, %112, %cst_26 [1] : vector<24x144xf32> to vector<24xf32>
    %114 = vector.shape_cast %113 : vector<24xf32> to vector<24x1xf32>
    %115 = vector.extract_strided_slice %114 {offsets = [0, 0], sizes = [8, 1], strides = [1, 1]} : vector<24x1xf32> to vector<8x1xf32>
    %116 = vector.extract_strided_slice %114 {offsets = [8, 0], sizes = [8, 1], strides = [1, 1]} : vector<24x1xf32> to vector<8x1xf32>
    %117 = arith.addf %115, %116 : vector<8x1xf32>
    %118 = vector.extract_strided_slice %114 {offsets = [16, 0], sizes = [8, 1], strides = [1, 1]} : vector<24x1xf32> to vector<8x1xf32>
    %119 = arith.addf %117, %118 : vector<8x1xf32>
    %cst_27 = arith.constant 0.00231481483 : f32
    %120 = vector.broadcast %cst_27 : f32 to vector<8x1xf32>
    %121 = arith.mulf %119, %120 : vector<8x1xf32>
    %122 = vector.extract_strided_slice %85 {offsets = [72, 0], sizes = [24, 144], strides = [1, 1]} : vector<144x144xf32> to vector<24x144xf32>
    %123 = vector.extract_strided_slice %85 {offsets = [96, 0], sizes = [24, 144], strides = [1, 1]} : vector<144x144xf32> to vector<24x144xf32>
    %124 = arith.mulf %122, %122 : vector<24x144xf32>
    %125 = arith.subf %123, %124 : vector<24x144xf32>
    %126 = vector.extract_strided_slice %85 {offsets = [120, 0], sizes = [24, 144], strides = [1, 1]} : vector<144x144xf32> to vector<24x144xf32>
    %127 = arith.mulf %122, %67 : vector<24x144xf32>
    %128 = arith.subf %126, %127 : vector<24x144xf32>
    %cst_28 = arith.constant 2.000000e+00 : f32
    %129 = vector.broadcast %cst_28 : f32 to vector<24x144xf32>
    %130 = arith.mulf %129, %122 : vector<24x144xf32>
    %131 = arith.mulf %130, %67 : vector<24x144xf32>
    %cst_29 = arith.constant 9.99999974E-5 : f32
    %132 = vector.broadcast %cst_29 : f32 to vector<24x144xf32>
    %133 = arith.addf %131, %132 : vector<24x144xf32>
    %cst_30 = arith.constant 2.000000e+00 : f32
    %134 = vector.broadcast %cst_30 : f32 to vector<24x144xf32>
    %135 = arith.mulf %134, %128 : vector<24x144xf32>
    %cst_31 = arith.constant 8.99999984E-4 : f32
    %136 = vector.broadcast %cst_31 : f32 to vector<24x144xf32>
    %137 = arith.addf %135, %136 : vector<24x144xf32>
    %138 = arith.mulf %133, %137 : vector<24x144xf32>
    %139 = arith.mulf %122, %122 : vector<24x144xf32>
    %140 = arith.mulf %67, %67 : vector<24x144xf32>
    %141 = arith.addf %139, %140 : vector<24x144xf32>
    %cst_32 = arith.constant 9.99999974E-5 : f32
    %142 = vector.broadcast %cst_32 : f32 to vector<24x144xf32>
    %143 = arith.addf %141, %142 : vector<24x144xf32>
    %144 = arith.addf %125, %77 : vector<24x144xf32>
    %cst_33 = arith.constant 8.99999984E-4 : f32
    %145 = vector.broadcast %cst_33 : f32 to vector<24x144xf32>
    %146 = arith.addf %144, %145 : vector<24x144xf32>
    %147 = arith.mulf %143, %146 : vector<24x144xf32>
    %148 = arith.divf %138, %147 : vector<24x144xf32>
    %cst_34 = arith.constant dense<0.000000e+00> : vector<24xf32>
    %149 = vector.multi_reduction <add>, %148, %cst_34 [1] : vector<24x144xf32> to vector<24xf32>
    %150 = vector.shape_cast %149 : vector<24xf32> to vector<24x1xf32>
    %151 = vector.extract_strided_slice %150 {offsets = [0, 0], sizes = [8, 1], strides = [1, 1]} : vector<24x1xf32> to vector<8x1xf32>
    %152 = vector.extract_strided_slice %150 {offsets = [8, 0], sizes = [8, 1], strides = [1, 1]} : vector<24x1xf32> to vector<8x1xf32>
    %153 = arith.addf %151, %152 : vector<8x1xf32>
    %154 = vector.extract_strided_slice %150 {offsets = [16, 0], sizes = [8, 1], strides = [1, 1]} : vector<24x1xf32> to vector<8x1xf32>
    %155 = arith.addf %153, %154 : vector<8x1xf32>
    %cst_35 = arith.constant 0.00231481483 : f32
    %156 = vector.broadcast %cst_35 : f32 to vector<8x1xf32>
    %157 = arith.mulf %155, %156 : vector<8x1xf32>
    %158 = tpu.iota {dimensions = array<i32: 1>} : vector<8x128xi32>
    %159 = vector.extract_strided_slice %35 {offsets = [0, 0], sizes = [8, 1], strides = [1, 1]} : vector<16x1xf32> to vector<8x1xf32>
    %c1_i32 = arith.constant 1 : i32
    %160 = vector.broadcast %c1_i32 : i32 to vector<8x128xi32>
    %161 = arith.cmpi eq, %158, %160 : vector<8x128xi32>
    %c0_i32 = arith.constant 0 : i32
    %162 = vector.broadcast %c0_i32 : i32 to vector<8x128xi32>
    %163 = arith.cmpi eq, %158, %162 : vector<8x128xi32>
    %cst_36 = arith.constant 0.000000e+00 : f32
    %164 = vector.shape_cast %159 : vector<8x1xf32> to vector<8x1xf32>
    %165 = vector.broadcast %164 : vector<8x1xf32> to vector<8x128xf32>
    %166 = vector.broadcast %cst_36 : f32 to vector<8x128xf32>
    %167 = arith.select %163, %165, %166 : vector<8x128xi1>, vector<8x128xf32>
    %168 = vector.shape_cast %121 : vector<8x1xf32> to vector<8x1xf32>
    %169 = vector.broadcast %168 : vector<8x1xf32> to vector<8x128xf32>
    %170 = arith.select %161, %169, %167 : vector<8x128xi1>, vector<8x128xf32>
    %c0_37 = arith.constant 0 : index
    %c0_38 = arith.constant 0 : index
    %171 = vector.load %arg8[%c0_37, %c0_38] : memref<8x128xf32, #tpu.memory_space<vmem>>, vector<8x128xf32>
    tpu.vector_store %arg8[%c0_37, %c0_38], %170 {strides = array<i32>} : memref<8x128xf32, #tpu.memory_space<vmem>>, vector<8x128xf32>,
    %172 = vector.extract_strided_slice %35 {offsets = [8, 0], sizes = [8, 1], strides = [1, 1]} : vector<16x1xf32> to vector<8x1xf32>
    %c1_i32_39 = arith.constant 1 : i32
    %173 = vector.broadcast %c1_i32_39 : i32 to vector<8x128xi32>
    %174 = arith.cmpi eq, %158, %173 : vector<8x128xi32>
    %c0_i32_40 = arith.constant 0 : i32
    %175 = vector.broadcast %c0_i32_40 : i32 to vector<8x128xi32>
    %176 = arith.cmpi eq, %158, %175 : vector<8x128xi32>
    %cst_41 = arith.constant 0.000000e+00 : f32
    %177 = vector.shape_cast %172 : vector<8x1xf32> to vector<8x1xf32>
    %178 = vector.broadcast %177 : vector<8x1xf32> to vector<8x128xf32>
    %179 = vector.broadcast %cst_41 : f32 to vector<8x128xf32>
    %180 = arith.select %176, %178, %179 : vector<8x128xi1>, vector<8x128xf32>
    %181 = vector.shape_cast %157 : vector<8x1xf32> to vector<8x1xf32>
    %182 = vector.broadcast %181 : vector<8x1xf32> to vector<8x128xf32>
    %183 = arith.select %174, %182, %180 : vector<8x128xi1>, vector<8x128xf32>
    %c0_42 = arith.constant 0 : index
    %c0_43 = arith.constant 0 : index
    %184 = vector.load %arg9[%c0_42, %c0_43] : memref<8x128xf32, #tpu.memory_space<vmem>>, vector<8x128xf32>
    tpu.vector_store %arg9[%c0_42, %c0_43], %183 {strides = array<i32>} : memref<8x128xf32, #tpu.memory_space<vmem>>, vector<8x128xf32>,
    %185 = tpu.iota {dimensions = array<i32: 0>} : vector<8x768xi32>
    %c8_i32 = arith.constant 8 : i32
    %186 = arith.muli %arg0, %c8_i32 : i32
    %187 = vector.broadcast %186 : i32 to vector<8x768xi32>
    %188 = arith.addi %185, %187 : vector<8x768xi32>
    %c8_i32_44 = arith.constant 8 : i32
    %189 = vector.broadcast %c8_i32_44 : i32 to vector<8x768xi32>
    %190 = arith.cmpi slt, %188, %189 : vector<8x768xi32>
    %c9_i32 = arith.constant 9 : i32
    %191 = vector.broadcast %c9_i32 : i32 to vector<8x768xi32>
    %192 = arith.cmpi sge, %188, %191 : vector<8x768xi32>
    %193 = arith.andi %192, %190 : vector<8x768xi1>
    %cst_45 = arith.constant 1.000000e+00 : f32
    %cst_46 = arith.constant 0.000000e+00 : f32
    %194 = vector.broadcast %cst_45 : f32 to vector<8x768xf32>
    %195 = vector.broadcast %cst_46 : f32 to vector<8x768xf32>
    %196 = arith.select %193, %194, %195 : vector<8x768xi1>, vector<8x768xf32>
    %c1_i32_47 = arith.constant 1 : i32
    %197 = vector.broadcast %c1_i32_47 : i32 to vector<8x768xi32>
    %198 = arith.cmpi sge, %188, %197 : vector<8x768xi32>
    %199 = arith.andi %198, %190 : vector<8x768xi1>
    %cst_48 = arith.constant 1.000000e+00 : f32
    %cst_49 = arith.constant 0.000000e+00 : f32
    %200 = vector.broadcast %cst_48 : f32 to vector<8x768xf32>
    %201 = vector.broadcast %cst_49 : f32 to vector<8x768xf32>
    %202 = arith.select %199, %200, %201 : vector<8x768xi1>, vector<8x768xf32>
    %203 = arith.addf %196, %202 : vector<8x768xf32>
    %c-7_i32 = arith.constant -7 : i32
    %204 = vector.broadcast %c-7_i32 : i32 to vector<8x768xi32>
    %205 = arith.cmpi sge, %188, %204 : vector<8x768xi32>
    %206 = arith.andi %205, %190 : vector<8x768xi1>
    %cst_50 = arith.constant 1.000000e+00 : f32
    %cst_51 = arith.constant 0.000000e+00 : f32
    %207 = vector.broadcast %cst_50 : f32 to vector<8x768xf32>
    %208 = vector.broadcast %cst_51 : f32 to vector<8x768xf32>
    %209 = arith.select %206, %207, %208 : vector<8x768xi1>, vector<8x768xf32>
    %210 = arith.mulf %0, %203 : vector<8x768xf32>
    %cst_52 = arith.constant dense<0.000000e+00> : vector<768xf32>
    %211 = vector.multi_reduction <add>, %210, %cst_52 [0] : vector<8x768xf32> to vector<768xf32>
    %212 = vector.shape_cast %211 : vector<768xf32> to vector<1x768xf32>
    %213 = arith.mulf %15, %209 : vector<8x768xf32>
    %cst_53 = arith.constant dense<0.000000e+00> : vector<768xf32>
    %214 = vector.multi_reduction <add>, %213, %cst_53 [0] : vector<8x768xf32> to vector<768xf32>
    %215 = vector.shape_cast %214 : vector<768xf32> to vector<1x768xf32>
    %216 = arith.addf %212, %215 : vector<1x768xf32>
    %cst_54 = arith.constant 0.0666666701 : f32
    %217 = vector.broadcast %cst_54 : f32 to vector<1x768xf32>
    %218 = arith.mulf %216, %217 : vector<1x768xf32>
    %219 = tpu.iota {dimensions = array<i32: 0>} : vector<8x768xi32>
    %c0_i32_55 = arith.constant 0 : i32
    %220 = vector.broadcast %c0_i32_55 : i32 to vector<8x768xi32>
    %221 = arith.cmpi eq, %219, %220 : vector<8x768xi32>
    %222 = vector.shape_cast %218 : vector<1x768xf32> to vector<1x768xf32>
    %223 = vector.broadcast %222 : vector<1x768xf32> to vector<8x768xf32>
    %cst_56 = arith.constant 0.000000e+00 : f32
    %224 = vector.broadcast %cst_56 : f32 to vector<8x768xf32>
    %225 = arith.select %221, %223, %224 : vector<8x768xi1>, vector<8x768xf32>
    %c0_57 = arith.constant 0 : index
    %c0_58 = arith.constant 0 : index
    %226 = vector.load %arg10[%c0_57, %c0_58] : memref<8x768xf32, #tpu.memory_space<vmem>>, vector<8x768xf32>
    tpu.vector_store %arg10[%c0_57, %c0_58], %225 {strides = array<i32>} : memref<8x768xf32, #tpu.memory_space<vmem>>, vector<8x768xf32>,
    return
  }
  func.func @transform_0(%arg0: i32) -> (i32, i32) {
    %c0_i32 = arith.constant 0 : i32
    %c0_i32_0 = arith.constant 0 : i32
    return %arg0, %c0_i32 : i32, i32
  }
  func.func @transform_1(%arg0: i32) -> (i32, i32) {
    %c0_i32 = arith.constant 0 : i32
    %c0_i32_0 = arith.constant 0 : i32
    %c0_i32_1 = arith.constant 0 : i32
    return %c0_i32, %c0_i32_0 : i32, i32
  }
  func.func @transform_2(%arg0: i32) -> (i32, i32) {
    %c0_i32 = arith.constant 0 : i32
    %c0_i32_0 = arith.constant 0 : i32
    %c0_i32_1 = arith.constant 0 : i32
    return %c0_i32, %c0_i32_0 : i32, i32
  }
  func.func @transform_3(%arg0: i32) -> (i32, i32) {
    %c0_i32 = arith.constant 0 : i32
    %c0_i32_0 = arith.constant 0 : i32
    %c0_i32_1 = arith.constant 0 : i32
    return %c0_i32, %c0_i32_0 : i32, i32
  }
  func.func @transform_4(%arg0: i32) -> (i32, i32) {
    %c0_i32 = arith.constant 0 : i32
    %c0_i32_0 = arith.constant 0 : i32
    %c0_i32_1 = arith.constant 0 : i32
    return %c0_i32, %c0_i32_0 : i32, i32
  }
  func.func @transform_5(%arg0: i32) -> (i32, i32) {
    %c0_i32 = arith.constant 0 : i32
    %c0_i32_0 = arith.constant 0 : i32
    %c0_i32_1 = arith.constant 0 : i32
    return %c0_i32, %c0_i32_0 : i32, i32
  }
  func.func @transform_6(%arg0: i32) -> (i32, i32) {
    %c0_i32 = arith.constant 0 : i32
    %c0_i32_0 = arith.constant 0 : i32
    return %arg0, %c0_i32 : i32, i32
  }
  func.func @transform_7(%arg0: i32) -> (i32, i32) {
    %c0_i32 = arith.constant 0 : i32
    %c0_i32_0 = arith.constant 0 : i32
    return %arg0, %c0_i32 : i32, i32
  }
  func.func @transform_8(%arg0: i32) -> (i32, i32) {
    %c0_i32 = arith.constant 0 : i32
    %c0_i32_0 = arith.constant 0 : i32
    return %arg0, %c0_i32 : i32, i32
  }
  func.func @transform_9(%arg0: i32) -> (i32, i32) {
    %c0_i32 = arith.constant 0 : i32
    %c0_i32_0 = arith.constant 0 : i32
    return %arg0, %c0_i32 : i32, i32
  }
}

</mosaic_0001>

<llo_original>
// kernel: _analyze.1
$region0: #{_analyze.1}
  #allocation0 [shape = 'u32[]', space=smem, size = 0x4, offset = 0x4, fixed_abs, tag = 'smem constant byte address 0x4 - core index']
  #allocation1 [shape = 'u32[144,128]{1,0:T(1,128)}', space=vmem, size = 0x12000, scoped, tag = 'internal scratch']
  %s0 = inlined_call_operand.vmem [shape: f32[8,768], index: 0, kind: input, shape index: {}]
  %s1 = inlined_call_operand.vmem [shape: f32[1,768], index: 1, kind: input, shape index: {}]
  %s2 = inlined_call_operand.vmem [shape: bf16[256,256], index: 2, kind: input, shape index: {}]
  %s3 = inlined_call_operand.vmem [shape: f32[256,144], index: 3, kind: input, shape index: {}]
  %s4 = inlined_call_operand.vmem [shape: bf16[768,128], index: 4, kind: input, shape index: {}]
  %s5 = inlined_call_operand.vmem [shape: f32[1,128], index: 5, kind: input, shape index: {}]
  %s6 = inlined_call_operand.hbm [shape: f32[8,768], index: 6, kind: output, shape index: {0}]
  %s7 = inlined_call_operand.vmem [shape: f32[8,128], index: 7, kind: output, shape index: {1}]
  %s8 = inlined_call_operand.vmem [shape: f32[8,128], index: 8, kind: output, shape index: {2}]
  %s9 = inlined_call_operand.vmem [shape: f32[8,768], index: 9, kind: output, shape index: {3}]
  %10 = xla_tuple %s6, %s7, %s8, %s9
  %s11 = sld [smem:[#allocation0]]
  $region58: #{_analyze.1} parent=0
    _
  %s13 = ssub.s32 1, %s11
  %s14 = scalar_select 0, %s13, %s11
  $region1: #{_analyze.1} parent=0
    #allocation2 [shape = 'u8[24576]{0}', space=vmem, size = 0x6000, scoped, tag = 'output window, operand 0, single buffered']
    #allocation3 [shape = 's32[1]{0}', space=sflag, size = 0x4, scoped, tag = 'scoped memory for _analyze.1']
    %15 = vsyncpa [#allocation3], 0
    // Predicated region
    $region2: #{_analyze.1} parent=1 // pred_check
      _
    $region3: #{_analyze.1} parent=1 // pred_check_branch
      %17 = sbr.rel (0) target = $region5
    $region4: #{_analyze.1} parent=1 // pred_region
      _
    $region5: #{_analyze.1} parent=1 // pred_fallthru
      _
    // Predicated region
    $region6: #{_analyze.1} parent=1 // pred_check
      _
    $region7: #{_analyze.1} parent=1 // pred_check_branch
      %19 = sbr.rel (0) target = $region9
    $region8: #{_analyze.1} parent=1 // pred_region
      _
    $region9: #{_analyze.1} parent=1 // pred_fallthru
      _
    // Predicated region
    $region10: #{_analyze.1} parent=1 // pred_check
      _
    $region11: #{_analyze.1} parent=1 // pred_check_branch
      %21 = sbr.rel (0) target = $region13
    $region12: #{_analyze.1} parent=1 // pred_region
      _
    $region13: #{_analyze.1} parent=1 // pred_fallthru
      _
    // Predicated region
    $region14: #{_analyze.1} parent=1 // pred_check
      _
    $region15: #{_analyze.1} parent=1 // pred_check_branch
      %23 = sbr.rel (0) target = $region17
    $region16: #{_analyze.1} parent=1 // pred_region
      _
    $region17: #{_analyze.1} parent=1 // pred_fallthru
      _
    // Predicated region
    $region18: #{_analyze.1} parent=1 // pred_check
      _
    $region19: #{_analyze.1} parent=1 // pred_check_branch
      %25 = sbr.rel (0) target = $region21
    $region20: #{_analyze.1} parent=1 // pred_region
      _
    $region21: #{_analyze.1} parent=1 // pred_fallthru
      _
    // Predicated region
    $region22: #{_analyze.1} parent=1 // pred_check
      _
    $region23: #{_analyze.1} parent=1 // pred_check_branch
      %27 = sbr.rel (0) target = $region25
    $region24: #{_analyze.1} parent=1 // pred_region
      _
    $region25: #{_analyze.1} parent=1 // pred_fallthru
      _
    %v29 = vld [vmem:[%s0] sm:$0xff]
    %v30 = vld [vmem:[%s0 + $0x8] sm:$0xff]
    %v31 = vld [vmem:[%s0 + $0x10] sm:$0xff]
    %v32 = vld [vmem:[%s0 + $0x18] sm:$0xff]
    %v33 = vld [vmem:[%s0 + $0x20] sm:$0xff]
    %v34 = vld [vmem:[%s0 + $0x28] sm:$0xff]
    %v35 = vld [vmem:[%s1] sm:$0x3f]
    %v36 = vld [vmem:[%s2] sm:$0xff]
    %v37 = vld [vmem:[%s2 + $0x8] sm:$0xff]
    %v38 = vld [vmem:[%s2 + $0x10] sm:$0xff]
    %v39 = vld [vmem:[%s2 + $0x18] sm:$0xff]
    %v40 = vld [vmem:[%s2 + $0x20] sm:$0xff]
    %v41 = vld [vmem:[%s2 + $0x28] sm:$0xff]
    %v42 = vld [vmem:[%s2 + $0x30] sm:$0xff]
    %v43 = vld [vmem:[%s2 + $0x38] sm:$0xff]
    %v44 = vld [vmem:[%s2 + $0x40] sm:$0xff]
    %v45 = vld [vmem:[%s2 + $0x48] sm:$0xff]
    %v46 = vld [vmem:[%s2 + $0x50] sm:$0xff]
    %v47 = vld [vmem:[%s2 + $0x58] sm:$0xff]
    %v48 = vld [vmem:[%s2 + $0x60] sm:$0xff]
    %v49 = vld [vmem:[%s2 + $0x68] sm:$0xff]
    %v50 = vld [vmem:[%s2 + $0x70] sm:$0xff]
    %v51 = vld [vmem:[%s2 + $0x78] sm:$0xff]
    %v52 = vld [vmem:[%s2 + $0x80] sm:$0xff]
    %v53 = vld [vmem:[%s2 + $0x88] sm:$0xff]
    %v54 = vld [vmem:[%s2 + $0x90] sm:$0xff]
    %v55 = vld [vmem:[%s2 + $0x98] sm:$0xff]
    %v56 = vld [vmem:[%s2 + $0xa0] sm:$0xff]
    %v57 = vld [vmem:[%s2 + $0xa8] sm:$0xff]
    %v58 = vld [vmem:[%s2 + $0xb0] sm:$0xff]
    %v59 = vld [vmem:[%s2 + $0xb8] sm:$0xff]
    %v60 = vld [vmem:[%s2 + $0xc0] sm:$0xff]
    %v61 = vld [vmem:[%s2 + $0xc8] sm:$0xff]
    %v62 = vld [vmem:[%s2 + $0xd0] sm:$0xff]
    %v63 = vld [vmem:[%s2 + $0xd8] sm:$0xff]
    %v64 = vld [vmem:[%s2 + $0xe0] sm:$0xff]
    %v65 = vld [vmem:[%s2 + $0xe8] sm:$0xff]
    %v66 = vld [vmem:[%s2 + $0xf0] sm:$0xff]
    %v67 = vld [vmem:[%s2 + $0xf8] sm:$0xff]
    %v68 = vld [vmem:[%s3] sm:$0xff]
    %v69 = vld [vmem:[%s3 + $0x8] sm:$0xff]
    %v70 = vld [vmem:[%s3 + $0x10] sm:$0xff]
    %v71 = vld [vmem:[%s3 + $0x18] sm:$0xff]
    %v72 = vld [vmem:[%s3 + $0x20] sm:$0xff]
    %v73 = vld [vmem:[%s3 + $0x28] sm:$0xff]
    %v74 = vld [vmem:[%s3 + $0x30] sm:$0xff]
    %v75 = vld [vmem:[%s3 + $0x38] sm:$0xff]
    %v76 = vld [vmem:[%s3 + $0x40] sm:$0xff]
    %v77 = vld [vmem:[%s3 + $0x48] sm:$0xff]
    %v78 = vld [vmem:[%s3 + $0x50] sm:$0xff]
    %v79 = vld [vmem:[%s3 + $0x58] sm:$0xff]
    %v80 = vld [vmem:[%s3 + $0x60] sm:$0xff]
    %v81 = vld [vmem:[%s3 + $0x68] sm:$0xff]
    %v82 = vld [vmem:[%s3 + $0x70] sm:$0xff]
    %v83 = vld [vmem:[%s3 + $0x78] sm:$0xff]
    %v84 = vld [vmem:[%s3 + $0x80] sm:$0xff]
    %v85 = vld [vmem:[%s3 + $0x88] sm:$0xff]
    %v86 = vld [vmem:[%s3 + $0x90] sm:$0xff]
    %v87 = vld [vmem:[%s3 + $0x98] sm:$0xff]
    %v88 = vld [vmem:[%s3 + $0xa0] sm:$0xff]
    %v89 = vld [vmem:[%s3 + $0xa8] sm:$0xff]
    %v90 = vld [vmem:[%s3 + $0xb0] sm:$0xff]
    %v91 = vld [vmem:[%s3 + $0xb8] sm:$0xff]
    %v92 = vld [vmem:[%s3 + $0xc0] sm:$0xff]
    %v93 = vld [vmem:[%s3 + $0xc8] sm:$0xff]
    %v94 = vld [vmem:[%s3 + $0xd0] sm:$0xff]
    %v95 = vld [vmem:[%s3 + $0xd8] sm:$0xff]
    %v96 = vld [vmem:[%s3 + $0xe0] sm:$0xff]
    %v97 = vld [vmem:[%s3 + $0xe8] sm:$0xff]
    %v98 = vld [vmem:[%s3 + $0xf0] sm:$0xff]
    %v99 = vld [vmem:[%s3 + $0xf8] sm:$0xff]
    %v100 = vld [vmem:[%s3 + $0x100] sm:$0xff]
    %v101 = vld [vmem:[%s3 + $0x108] sm:$0xff]
    %v102 = vld [vmem:[%s3 + $0x110] sm:$0xff]
    %v103 = vld [vmem:[%s3 + $0x118] sm:$0xff]
    %v104 = vld [vmem:[%s3 + $0x120] sm:$0xff]
    %v105 = vld [vmem:[%s3 + $0x128] sm:$0xff]
    %v106 = vld [vmem:[%s3 + $0x130] sm:$0xff]
    %v107 = vld [vmem:[%s3 + $0x138] sm:$0xff]
    %v108 = vld [vmem:[%s3 + $0x140] sm:$0xff]
    %v109 = vld [vmem:[%s3 + $0x148] sm:$0xff]
    %v110 = vld [vmem:[%s3 + $0x150] sm:$0xff]
    %v111 = vld [vmem:[%s3 + $0x158] sm:$0xff]
    %v112 = vld [vmem:[%s3 + $0x160] sm:$0xff]
    %v113 = vld [vmem:[%s3 + $0x168] sm:$0xff]
    %v114 = vld [vmem:[%s3 + $0x170] sm:$0xff]
    %v115 = vld [vmem:[%s3 + $0x178] sm:$0xff]
    %v116 = vld [vmem:[%s3 + $0x180] sm:$0xff]
    %v117 = vld [vmem:[%s3 + $0x188] sm:$0xff]
    %v118 = vld [vmem:[%s3 + $0x190] sm:$0xff]
    %v119 = vld [vmem:[%s3 + $0x198] sm:$0xff]
    %v120 = vld [vmem:[%s3 + $0x1a0] sm:$0xff]
    %v121 = vld [vmem:[%s3 + $0x1a8] sm:$0xff]
    %v122 = vld [vmem:[%s3 + $0x1b0] sm:$0xff]
    %v123 = vld [vmem:[%s3 + $0x1b8] sm:$0xff]
    %v124 = vld [vmem:[%s3 + $0x1c0] sm:$0xff]
    %v125 = vld [vmem:[%s3 + $0x1c8] sm:$0xff]
    %v126 = vld [vmem:[%s3 + $0x1d0] sm:$0xff]
    %v127 = vld [vmem:[%s3 + $0x1d8] sm:$0xff]
    %v128 = vld [vmem:[%s3 + $0x1e0] sm:$0xff]
    %v129 = vld [vmem:[%s3 + $0x1e8] sm:$0xff]
    %v130 = vld [vmem:[%s3 + $0x1f0] sm:$0xff]
    %v131 = vld [vmem:[%s3 + $0x1f8] sm:$0xff]
    %v132 = vld [vmem:[%s4] sm:$0xf]
    %v133 = vld [vmem:[%s4 + $0x4] sm:$0xf]
    %v134 = vld [vmem:[%s4 + $0x8] sm:$0xf]
    %v135 = vld [vmem:[%s4 + $0xc] sm:$0xf]
    %v136 = vld [vmem:[%s4 + $0x10] sm:$0xf]
    %v137 = vld [vmem:[%s4 + $0x14] sm:$0xf]
    %v138 = vld [vmem:[%s4 + $0x18] sm:$0xf]
    %v139 = vld [vmem:[%s4 + $0x1c] sm:$0xf]
    %v140 = vld [vmem:[%s4 + $0x20] sm:$0xf]
    %v141 = vld [vmem:[%s4 + $0x24] sm:$0xf]
    %v142 = vld [vmem:[%s4 + $0x28] sm:$0xf]
    %v143 = vld [vmem:[%s4 + $0x2c] sm:$0xf]
    %v144 = vld [vmem:[%s4 + $0x30] sm:$0xf]
    %v145 = vld [vmem:[%s4 + $0x34] sm:$0xf]
    %v146 = vld [vmem:[%s4 + $0x38] sm:$0xf]
    %v147 = vld [vmem:[%s4 + $0x3c] sm:$0xf]
    %v148 = vld [vmem:[%s4 + $0x40] sm:$0xf]
    %v149 = vld [vmem:[%s4 + $0x44] sm:$0xf]
    %v150 = vld [vmem:[%s4 + $0x48] sm:$0xf]
    %v151 = vld [vmem:[%s4 + $0x4c] sm:$0xf]
    %v152 = vld [vmem:[%s4 + $0x50] sm:$0xf]
    %v153 = vld [vmem:[%s4 + $0x54] sm:$0xf]
    %v154 = vld [vmem:[%s4 + $0x58] sm:$0xf]
    %v155 = vld [vmem:[%s4 + $0x5c] sm:$0xf]
    %v156 = vld [vmem:[%s4 + $0x60] sm:$0xf]
    %v157 = vld [vmem:[%s4 + $0x64] sm:$0xf]
    %v158 = vld [vmem:[%s4 + $0x68] sm:$0xf]
    %v159 = vld [vmem:[%s4 + $0x6c] sm:$0xf]
    %v160 = vld [vmem:[%s4 + $0x70] sm:$0xf]
    %v161 = vld [vmem:[%s4 + $0x74] sm:$0xf]
    %v162 = vld [vmem:[%s4 + $0x78] sm:$0xf]
    %v163 = vld [vmem:[%s4 + $0x7c] sm:$0xf]
    %v164 = vld [vmem:[%s4 + $0x80] sm:$0xf]
    %v165 = vld [vmem:[%s4 + $0x84] sm:$0xf]
    %v166 = vld [vmem:[%s4 + $0x88] sm:$0xf]
    %v167 = vld [vmem:[%s4 + $0x8c] sm:$0xf]
    %v168 = vld [vmem:[%s4 + $0x90] sm:$0xf]
    %v169 = vld [vmem:[%s4 + $0x94] sm:$0xf]
    %v170 = vld [vmem:[%s4 + $0x98] sm:$0xf]
    %v171 = vld [vmem:[%s4 + $0x9c] sm:$0xf]
    %v172 = vld [vmem:[%s4 + $0xa0] sm:$0xf]
    %v173 = vld [vmem:[%s4 + $0xa4] sm:$0xf]
    %v174 = vld [vmem:[%s4 + $0xa8] sm:$0xf]
    %v175 = vld [vmem:[%s4 + $0xac] sm:$0xf]
    %v176 = vld [vmem:[%s4 + $0xb0] sm:$0xf]
    %v177 = vld [vmem:[%s4 + $0xb4] sm:$0xf]
    %v178 = vld [vmem:[%s4 + $0xb8] sm:$0xf]
    %v179 = vld [vmem:[%s4 + $0xbc] sm:$0xf]
    %v180 = vld [vmem:[%s4 + $0xc0] sm:$0xf]
    %v181 = vld [vmem:[%s4 + $0xc4] sm:$0xf]
    %v182 = vld [vmem:[%s4 + $0xc8] sm:$0xf]
    %v183 = vld [vmem:[%s4 + $0xcc] sm:$0xf]
    %v184 = vld [vmem:[%s4 + $0xd0] sm:$0xf]
    %v185 = vld [vmem:[%s4 + $0xd4] sm:$0xf]
    %v186 = vld [vmem:[%s4 + $0xd8] sm:$0xf]
    %v187 = vld [vmem:[%s4 + $0xdc] sm:$0xf]
    %v188 = vld [vmem:[%s4 + $0xe0] sm:$0xf]
    %v189 = vld [vmem:[%s4 + $0xe4] sm:$0xf]
    %v190 = vld [vmem:[%s4 + $0xe8] sm:$0xf]
    %v191 = vld [vmem:[%s4 + $0xec] sm:$0xf]
    %v192 = vld [vmem:[%s4 + $0xf0] sm:$0xf]
    %v193 = vld [vmem:[%s4 + $0xf4] sm:$0xf]
    %v194 = vld [vmem:[%s4 + $0xf8] sm:$0xf]
    %v195 = vld [vmem:[%s4 + $0xfc] sm:$0xf]
    %v196 = vld [vmem:[%s4 + $0x100] sm:$0xf]
    %v197 = vld [vmem:[%s4 + $0x104] sm:$0xf]
    %v198 = vld [vmem:[%s4 + $0x108] sm:$0xf]
    %v199 = vld [vmem:[%s4 + $0x10c] sm:$0xf]
    %v200 = vld [vmem:[%s4 + $0x110] sm:$0xf]
    %v201 = vld [vmem:[%s4 + $0x114] sm:$0xf]
    %v202 = vld [vmem:[%s4 + $0x118] sm:$0xf]
    %v203 = vld [vmem:[%s4 + $0x11c] sm:$0xf]
    %v204 = vld [vmem:[%s4 + $0x120] sm:$0xf]
    %v205 = vld [vmem:[%s4 + $0x124] sm:$0xf]
    %v206 = vld [vmem:[%s4 + $0x128] sm:$0xf]
    %v207 = vld [vmem:[%s4 + $0x12c] sm:$0xf]
    %v208 = vld [vmem:[%s4 + $0x130] sm:$0xf]
    %v209 = vld [vmem:[%s4 + $0x134] sm:$0xf]
    %v210 = vld [vmem:[%s4 + $0x138] sm:$0xf]
    %v211 = vld [vmem:[%s4 + $0x13c] sm:$0xf]
    %v212 = vld [vmem:[%s4 + $0x140] sm:$0xf]
    %v213 = vld [vmem:[%s4 + $0x144] sm:$0xf]
    %v214 = vld [vmem:[%s4 + $0x148] sm:$0xf]
    %v215 = vld [vmem:[%s4 + $0x14c] sm:$0xf]
    %v216 = vld [vmem:[%s4 + $0x150] sm:$0xf]
    %v217 = vld [vmem:[%s4 + $0x154] sm:$0xf]
    %v218 = vld [vmem:[%s4 + $0x158] sm:$0xf]
    %v219 = vld [vmem:[%s4 + $0x15c] sm:$0xf]
    %v220 = vld [vmem:[%s4 + $0x160] sm:$0xf]
    %v221 = vld [vmem:[%s4 + $0x164] sm:$0xf]
    %v222 = vld [vmem:[%s4 + $0x168] sm:$0xf]
    %v223 = vld [vmem:[%s4 + $0x16c] sm:$0xf]
    %v224 = vld [vmem:[%s4 + $0x170] sm:$0xf]
    %v225 = vld [vmem:[%s4 + $0x174] sm:$0xf]
    %v226 = vld [vmem:[%s4 + $0x178] sm:$0xf]
    %v227 = vld [vmem:[%s4 + $0x17c] sm:$0xf]
    %v228 = vld [vmem:[%s5] sm:$0x1]
    %v229 = vpack.c.bf16 %v31, %v29
    %v230 = vpack.c.bf16 %v32, %v30
    %v231 = vpack.c.bf16 %v33, %v33
    %v232 = vpack.c.bf16 %v34, %v34
    %v265 = vunpack.c.l.b16 %v36
    %v266 = vunpack.c.h.b16 %v36
    %v267 = vunpack.c.l.b16 %v37
    %v268 = vunpack.c.h.b16 %v37
    %v269 = vunpack.c.l.b16 %v38
    %v270 = vunpack.c.h.b16 %v38
    %v271 = vunpack.c.l.b16 %v39
    %v272 = vunpack.c.h.b16 %v39
    %v273 = vunpack.c.l.b16 %v40
    %v274 = vunpack.c.h.b16 %v40
    %v275 = vunpack.c.l.b16 %v41
    %v276 = vunpack.c.h.b16 %v41
    %v277 = vunpack.c.l.b16 %v42
    %v278 = vunpack.c.h.b16 %v42
    %v279 = vunpack.c.l.b16 %v43
    %v280 = vunpack.c.h.b16 %v43
    %v281 = vunpack.c.l.b16 %v44
    %v282 = vunpack.c.h.b16 %v44
    %v283 = vunpack.c.l.b16 %v45
    %v284 = vunpack.c.h.b16 %v45
    %v285 = vunpack.c.l.b16 %v46
    %v286 = vunpack.c.h.b16 %v46
    %v287 = vunpack.c.l.b16 %v47
    %v288 = vunpack.c.h.b16 %v47
    %v289 = vunpack.c.l.b16 %v48
    %v290 = vunpack.c.h.b16 %v48
    %v291 = vunpack.c.l.b16 %v49
    %v292 = vunpack.c.h.b16 %v49
    %v293 = vunpack.c.l.b16 %v50
    %v294 = vunpack.c.h.b16 %v50
    %v295 = vunpack.c.l.b16 %v51
    %v296 = vunpack.c.h.b16 %v51
    %v297 = vunpack.c.l.b16 %v52
    %v298 = vunpack.c.h.b16 %v52
    %v299 = vunpack.c.l.b16 %v53
    %v300 = vunpack.c.h.b16 %v53
    %v301 = vunpack.c.l.b16 %v54
    %v302 = vunpack.c.h.b16 %v54
    %v303 = vunpack.c.l.b16 %v55
    %v304 = vunpack.c.h.b16 %v55
    %v305 = vunpack.c.l.b16 %v56
    %v306 = vunpack.c.h.b16 %v56
    %v307 = vunpack.c.l.b16 %v57
    %v308 = vunpack.c.h.b16 %v57
    %v309 = vunpack.c.l.b16 %v58
    %v310 = vunpack.c.h.b16 %v58
    %v311 = vunpack.c.l.b16 %v59
    %v312 = vunpack.c.h.b16 %v59
    %v313 = vunpack.c.l.b16 %v60
    %v314 = vunpack.c.h.b16 %v60
    %v315 = vunpack.c.l.b16 %v61
    %v316 = vunpack.c.h.b16 %v61
    %v317 = vunpack.c.l.b16 %v62
    %v318 = vunpack.c.h.b16 %v62
    %v319 = vunpack.c.l.b16 %v63
    %v320 = vunpack.c.h.b16 %v63
    %v321 = vunpack.c.l.b16 %v64
    %v322 = vunpack.c.h.b16 %v64
    %v323 = vunpack.c.l.b16 %v65
    %v324 = vunpack.c.h.b16 %v65
    %v325 = vunpack.c.l.b16 %v66
    %v326 = vunpack.c.h.b16 %v66
    %v327 = vunpack.c.l.b16 %v67
    %v328 = vunpack.c.h.b16 %v67
    %v329 = vpack.c.b16 %v267, %v265
    %v330 = vpack.c.b16 %v268, %v266
    %v331 = vpack.c.b16 %v271, %v269
    %v332 = vpack.c.b16 %v272, %v270
    %v333 = vpack.c.b16 %v275, %v273
    %v334 = vpack.c.b16 %v276, %v274
    %v335 = vpack.c.b16 %v279, %v277
    %v336 = vpack.c.b16 %v280, %v278
    %v337 = vpack.c.b16 %v283, %v281
    %v338 = vpack.c.b16 %v284, %v282
    %v339 = vpack.c.b16 %v287, %v285
    %v340 = vpack.c.b16 %v288, %v286
    %v341 = vpack.c.b16 %v291, %v289
    %v342 = vpack.c.b16 %v292, %v290
    %v343 = vpack.c.b16 %v295, %v293
    %v344 = vpack.c.b16 %v296, %v294
    %v345 = vpack.c.b16 %v299, %v297
    %v346 = vpack.c.b16 %v300, %v298
    %v347 = vpack.c.b16 %v303, %v301
    %v348 = vpack.c.b16 %v304, %v302
    %v349 = vpack.c.b16 %v307, %v305
    %v350 = vpack.c.b16 %v308, %v306
    %v351 = vpack.c.b16 %v311, %v309
    %v352 = vpack.c.b16 %v312, %v310
    %v353 = vpack.c.b16 %v315, %v313
    %v354 = vpack.c.b16 %v316, %v314
    %v355 = vpack.c.b16 %v319, %v317
    %v356 = vpack.c.b16 %v320, %v318
    %v357 = vpack.c.b16 %v323, %v321
    %v358 = vpack.c.b16 %v324, %v322
    %v359 = vpack.c.b16 %v327, %v325
    %v360 = vpack.c.b16 %v328, %v326
    %393 = vmatprep.subr.bf16.mxu0 %v344
    %394 = vmatpush1.bf16.msra.mxu0 %v343
    %395 = vmatprep.subr.bf16.mxu0 %v342
    %396 = vmatpush1.bf16.msra.mxu0 %v341
    %397 = vmatprep.subr.bf16.mxu0 %v340
    %398 = vmatpush1.bf16.msra.mxu0 %v339
    %399 = vmatprep.subr.bf16.mxu0 %v338
    %400 = vmatpush1.bf16.msra.mxu0 %v337
    %401 = vmatprep.subr.bf16.mxu0 %v336
    %402 = vmatpush1.bf16.msra.mxu0 %v335
    %403 = vmatprep.subr.bf16.mxu0 %v334
    %404 = vmatpush1.bf16.msra.mxu0 %v333
    %405 = vmatprep.subr.bf16.mxu0 %v332
    %406 = vmatpush1.bf16.msra.mxu0 %v331
    %407 = vmatprep.subr.bf16.mxu0 %v330
    %408 = vmatpush1.bf16.msra.mxu0 %v329
    %409 = vmatprep.subr.bf16.mxu0 %v360
    %410 = vmatpush2.bf16.msra.mxu0 %v359
    %411 = vmatprep.subr.bf16.mxu0 %v358
    %412 = vmatpush2.bf16.msra.mxu0 %v357
    %413 = vmatprep.subr.bf16.mxu0 %v356
    %414 = vmatpush2.bf16.msra.mxu0 %v355
    %415 = vmatprep.subr.bf16.mxu0 %v354
    %416 = vmatpush2.bf16.msra.mxu0 %v353
    %417 = vmatprep.subr.bf16.mxu0 %v352
    %418 = vmatpush2.bf16.msra.mxu0 %v351
    %419 = vmatprep.subr.bf16.mxu0 %v350
    %420 = vmatpush2.bf16.msra.mxu0 %v349
    %421 = vmatprep.subr.bf16.mxu0 %v348
    %422 = vmatpush2.bf16.msra.mxu0 %v347
    %423 = vmatprep.subr.bf16.mxu0 %v346
    %424 = vmatpush2.bf16.msra.mxu0 %v345
    %425 = vmatprep.mubr.bf16.mxu0 %v230
    %426 = vmatmul.mubr.bf16.gmra.mxu0 %v229
    %v427 = vpop.f32.mrf.mxu0
    %v428 = vadd.f32 0.0, %v427
    %v429 = vpop.f32.mrf.mxu0
    %v430 = vadd.f32 0.0, %v429
    %v431 = vpop.f32.mrf.mxu0
    %v432 = vadd.f32 0.0, %v431
    %v433 = vpop.f32.mrf.mxu0
    %v434 = vadd.f32 0.0, %v433
    %435 = vmatprep.mubr.bf16.mxu0 %v232
    %436 = vmatmul.mubr.bf16.gmra.mxu0 %v231
    %v437 = vpop.f32.mrf.mxu0
    %v438 = vadd.f32 0.0, %v437
    %v439 = vpop.f32.mrf.mxu0
    %v440 = vadd.f32 0.0, %v439
    %v441 = vpop.f32.mrf.mxu0
    %v442 = vpop.f32.mrf.mxu0
    %443 = vdwg.mxu0
    %444 = vst [vmem:[#allocation2] sm:$0xff] %v428
    %445 = vst [vmem:[#allocation2 + $0x8] sm:$0xff] %v430
    %446 = vst [vmem:[#allocation2 + $0x10] sm:$0xff] %v432
    %447 = vst [vmem:[#allocation2 + $0x18] sm:$0xff] %v434
    %448 = vst [vmem:[#allocation2 + $0x20] sm:$0xff] %v438
    %449 = vst [vmem:[#allocation2 + $0x28] sm:$0xff] %v440
    %v450 = vpack.c.bf16 %v428, %v29
    %v451 = vpack.c.bf16 %v430, %v30
    %v452 = vpack.c.bf16 %v432, %v31
    %v453 = vpack.c.bf16 %v434, %v32
    %v454 = vpack.c.bf16 %v438, %v33
    %v455 = vpack.c.bf16 %v440, %v34
    %v457 = vlaneseq
    %v458 = vshrl.u32 %v457, 7
    %v459 = vsub.s32 0, %v458
    %v460 = vrot.slane %v228, %v459
    %v558 = vunpack.c.l.b16 %v132
    %v559 = vunpack.c.l.b16 %v133
    %v560 = vunpack.c.l.b16 %v134
    %v561 = vunpack.c.l.b16 %v135
    %v562 = vunpack.c.l.b16 %v136
    %v563 = vunpack.c.l.b16 %v137
    %v564 = vunpack.c.l.b16 %v138
    %v565 = vunpack.c.l.b16 %v139
    %v566 = vunpack.c.l.b16 %v140
    %v567 = vunpack.c.l.b16 %v141
    %v568 = vunpack.c.l.b16 %v142
    %v569 = vunpack.c.l.b16 %v143
    %v570 = vunpack.c.l.b16 %v144
    %v571 = vunpack.c.l.b16 %v145
    %v572 = vunpack.c.l.b16 %v146
    %v573 = vunpack.c.l.b16 %v147
    %v574 = vunpack.c.l.b16 %v148
    %v575 = vunpack.c.l.b16 %v149
    %v576 = vunpack.c.l.b16 %v150
    %v577 = vunpack.c.l.b16 %v151
    %v578 = vunpack.c.l.b16 %v152
    %v579 = vunpack.c.l.b16 %v153
    %v580 = vunpack.c.l.b16 %v154
    %v581 = vunpack.c.l.b16 %v155
    %v582 = vunpack.c.l.b16 %v156
    %v583 = vunpack.c.l.b16 %v157
    %v584 = vunpack.c.l.b16 %v158
    %v585 = vunpack.c.l.b16 %v159
    %v586 = vunpack.c.l.b16 %v160
    %v587 = vunpack.c.l.b16 %v161
    %v588 = vunpack.c.l.b16 %v162
    %v589 = vunpack.c.l.b16 %v163
    %v590 = vunpack.c.l.b16 %v164
    %v591 = vunpack.c.l.b16 %v165
    %v592 = vunpack.c.l.b16 %v166
    %v593 = vunpack.c.l.b16 %v167
    %v594 = vunpack.c.l.b16 %v168
    %v595 = vunpack.c.l.b16 %v169
    %v596 = vunpack.c.l.b16 %v170
    %v597 = vunpack.c.l.b16 %v171
    %v598 = vunpack.c.l.b16 %v172
    %v599 = vunpack.c.l.b16 %v173
    %v600 = vunpack.c.l.b16 %v174
    %v601 = vunpack.c.l.b16 %v175
    %v602 = vunpack.c.l.b16 %v176
    %v603 = vunpack.c.l.b16 %v177
    %v604 = vunpack.c.l.b16 %v178
    %v605 = vunpack.c.l.b16 %v179
    %v606 = vunpack.c.l.b16 %v180
    %v607 = vunpack.c.l.b16 %v181
    %v608 = vunpack.c.l.b16 %v182
    %v609 = vunpack.c.l.b16 %v183
    %v610 = vunpack.c.l.b16 %v184
    %v611 = vunpack.c.l.b16 %v185
    %v612 = vunpack.c.l.b16 %v186
    %v613 = vunpack.c.l.b16 %v187
    %v614 = vunpack.c.l.b16 %v188
    %v615 = vunpack.c.l.b16 %v189
    %v616 = vunpack.c.l.b16 %v190
    %v617 = vunpack.c.l.b16 %v191
    %v618 = vunpack.c.l.b16 %v192
    %v619 = vunpack.c.l.b16 %v193
    %v620 = vunpack.c.l.b16 %v194
    %v621 = vunpack.c.l.b16 %v195
    %v622 = vunpack.c.l.b16 %v196
    %v623 = vunpack.c.l.b16 %v197
    %v624 = vunpack.c.l.b16 %v198
    %v625 = vunpack.c.l.b16 %v199
    %v626 = vunpack.c.l.b16 %v200
    %v627 = vunpack.c.l.b16 %v201
    %v628 = vunpack.c.l.b16 %v202
    %v629 = vunpack.c.l.b16 %v203
    %v630 = vunpack.c.l.b16 %v204
    %v631 = vunpack.c.l.b16 %v205
    %v632 = vunpack.c.l.b16 %v206
    %v633 = vunpack.c.l.b16 %v207
    %v634 = vunpack.c.l.b16 %v208
    %v635 = vunpack.c.l.b16 %v209
    %v636 = vunpack.c.l.b16 %v210
    %v637 = vunpack.c.l.b16 %v211
    %v638 = vunpack.c.l.b16 %v212
    %v639 = vunpack.c.l.b16 %v213
    %v640 = vunpack.c.l.b16 %v214
    %v641 = vunpack.c.l.b16 %v215
    %v642 = vunpack.c.l.b16 %v216
    %v643 = vunpack.c.l.b16 %v217
    %v644 = vunpack.c.l.b16 %v218
    %v645 = vunpack.c.l.b16 %v219
    %v646 = vunpack.c.l.b16 %v220
    %v647 = vunpack.c.l.b16 %v221
    %v648 = vunpack.c.l.b16 %v222
    %v649 = vunpack.c.l.b16 %v223
    %v650 = vunpack.c.l.b16 %v224
    %v651 = vunpack.c.l.b16 %v225
    %v652 = vunpack.c.l.b16 %v226
    %v653 = vunpack.c.l.b16 %v227
    %v654 = vpack.c.b16 %v559, %v558
    %v655 = vpack.c.b16 %v561, %v560
    %v656 = vpack.c.b16 %v563, %v562
    %v657 = vpack.c.b16 %v565, %v564
    %v658 = vpack.c.b16 %v567, %v566
    %v659 = vpack.c.b16 %v569, %v568
    %v660 = vpack.c.b16 %v571, %v570
    %v661 = vpack.c.b16 %v573, %v572
    %v662 = vpack.c.b16 %v575, %v574
    %v663 = vpack.c.b16 %v577, %v576
    %v664 = vpack.c.b16 %v579, %v578
    %v665 = vpack.c.b16 %v581, %v580
    %v666 = vpack.c.b16 %v583, %v582
    %v667 = vpack.c.b16 %v585, %v584
    %v668 = vpack.c.b16 %v587, %v586
    %v669 = vpack.c.b16 %v589, %v588
    %v670 = vpack.c.b16 %v591, %v590
    %v671 = vpack.c.b16 %v593, %v592
    %v672 = vpack.c.b16 %v595, %v594
    %v673 = vpack.c.b16 %v597, %v596
    %v674 = vpack.c.b16 %v599, %v598
    %v675 = vpack.c.b16 %v601, %v600
    %v676 = vpack.c.b16 %v603, %v602
    %v677 = vpack.c.b16 %v605, %v604
    %v678 = vpack.c.b16 %v607, %v606
    %v679 = vpack.c.b16 %v609, %v608
    %v680 = vpack.c.b16 %v611, %v610
    %v681 = vpack.c.b16 %v613, %v612
    %v682 = vpack.c.b16 %v615, %v614
    %v683 = vpack.c.b16 %v617, %v616
    %v684 = vpack.c.b16 %v619, %v618
    %v685 = vpack.c.b16 %v621, %v620
    %v686 = vpack.c.b16 %v623, %v622
    %v687 = vpack.c.b16 %v625, %v624
    %v688 = vpack.c.b16 %v627, %v626
    %v689 = vpack.c.b16 %v629, %v628
    %v690 = vpack.c.b16 %v631, %v630
    %v691 = vpack.c.b16 %v633, %v632
    %v692 = vpack.c.b16 %v635, %v634
    %v693 = vpack.c.b16 %v637, %v636
    %v694 = vpack.c.b16 %v639, %v638
    %v695 = vpack.c.b16 %v641, %v640
    %v696 = vpack.c.b16 %v643, %v642
    %v697 = vpack.c.b16 %v645, %v644
    %v698 = vpack.c.b16 %v647, %v646
    %v699 = vpack.c.b16 %v649, %v648
    %v700 = vpack.c.b16 %v651, %v650
    %v701 = vpack.c.b16 %v653, %v652
    %750 = vmatprep.subr.bf16.mxu0 0
    %751 = vmatpush1.bf16.msra.mxu0 %v661
    %752 = vmatprep.subr.bf16.mxu0 0
    %753 = vmatpush1.bf16.msra.mxu0 %v660
    %754 = vmatprep.subr.bf16.mxu0 0
    %755 = vmatpush1.bf16.msra.mxu0 %v659
    %756 = vmatprep.subr.bf16.mxu0 0
    %757 = vmatpush1.bf16.msra.mxu0 %v658
    %758 = vmatprep.subr.bf16.mxu0 0
    %759 = vmatpush1.bf16.msra.mxu0 %v657
    %760 = vmatprep.subr.bf16.mxu0 0
    %761 = vmatpush1.bf16.msra.mxu0 %v656
    %762 = vmatprep.subr.bf16.mxu0 0
    %763 = vmatpush1.bf16.msra.mxu0 %v655
    %764 = vmatprep.subr.bf16.mxu0 0
    %765 = vmatpush1.bf16.msra.mxu0 %v654
    %766 = vmatprep.subr.bf16.mxu0 0
    %767 = vmatpush2.bf16.msra.mxu0 %v669
    %768 = vmatprep.subr.bf16.mxu0 0
    %769 = vmatpush2.bf16.msra.mxu0 %v668
    %770 = vmatprep.subr.bf16.mxu0 0
    %771 = vmatpush2.bf16.msra.mxu0 %v667
    %772 = vmatprep.subr.bf16.mxu0 0
    %773 = vmatpush2.bf16.msra.mxu0 %v666
    %774 = vmatprep.subr.bf16.mxu0 0
    %775 = vmatpush2.bf16.msra.mxu0 %v665
    %776 = vmatprep.subr.bf16.mxu0 0
    %777 = vmatpush2.bf16.msra.mxu0 %v664
    %778 = vmatprep.subr.bf16.mxu0 0
    %779 = vmatpush2.bf16.msra.mxu0 %v663
    %780 = vmatprep.subr.bf16.mxu0 0
    %781 = vmatpush2.bf16.msra.mxu0 %v662
    %782 = vmatprep.mubr.bf16.mxu0 %v451
    %783 = vmatmul.mubr.bf16.gmra.mxu0 %v450
    %v784 = vpop.f32.mrf.mxu0
    %v785 = vadd.f32 %v460, %v784
    %v786 = vpop.f32.mrf.mxu0
    %v787 = vpop.f32.mrf.mxu0
    %v788 = vadd.f32 %v460, %v787
    %v789 = vpop.f32.mrf.mxu0
    %790 = vdwg.mxu0
    %791 = vmatprep.subr.bf16.mxu0 0
    %792 = vmatpush1.bf16.msra.mxu0 %v677
    %793 = vmatprep.subr.bf16.mxu0 0
    %794 = vmatpush1.bf16.msra.mxu0 %v676
    %795 = vmatprep.subr.bf16.mxu0 0
    %796 = vmatpush1.bf16.msra.mxu0 %v675
    %797 = vmatprep.subr.bf16.mxu0 0
    %798 = vmatpush1.bf16.msra.mxu0 %v674
    %799 = vmatprep.subr.bf16.mxu0 0
    %800 = vmatpush1.bf16.msra.mxu0 %v673
    %801 = vmatprep.subr.bf16.mxu0 0
    %802 = vmatpush1.bf16.msra.mxu0 %v672
    %803 = vmatprep.subr.bf16.mxu0 0
    %804 = vmatpush1.bf16.msra.mxu0 %v671
    %805 = vmatprep.subr.bf16.mxu0 0
    %806 = vmatpush1.bf16.msra.mxu0 %v670
    %807 = vmatprep.subr.bf16.mxu0 0
    %808 = vmatpush2.bf16.msra.mxu0 %v685
    %809 = vmatprep.subr.bf16.mxu0 0
    %810 = vmatpush2.bf16.msra.mxu0 %v684
    %811 = vmatprep.subr.bf16.mxu0 0
    %812 = vmatpush2.bf16.msra.mxu0 %v683
    %813 = vmatprep.subr.bf16.mxu0 0
    %814 = vmatpush2.bf16.msra.mxu0 %v682
    %815 = vmatprep.subr.bf16.mxu0 0
    %816 = vmatpush2.bf16.msra.mxu0 %v681
    %817 = vmatprep.subr.bf16.mxu0 0
    %818 = vmatpush2.bf16.msra.mxu0 %v680
    %819 = vmatprep.subr.bf16.mxu0 0
    %820 = vmatpush2.bf16.msra.mxu0 %v679
    %821 = vmatprep.subr.bf16.mxu0 0
    %822 = vmatpush2.bf16.msra.mxu0 %v678
    %823 = vmatprep.mubr.bf16.mxu0 %v453
    %824 = vmatmul.mubr.bf16.gmra.mxu0 %v452
    %v825 = vpop.f32.mrf.mxu0
    %v826 = vadd.f32 %v785, %v825
    %v827 = vpop.f32.mrf.mxu0
    %v828 = vpop.f32.mrf.mxu0
    %v829 = vadd.f32 %v788, %v828
    %v830 = vpop.f32.mrf.mxu0
    %831 = vdwg.mxu0
    %832 = vmatprep.subr.bf16.mxu0 0
    %833 = vmatpush1.bf16.msra.mxu0 %v693
    %834 = vmatprep.subr.bf16.mxu0 0
    %835 = vmatpush1.bf16.msra.mxu0 %v692
    %836 = vmatprep.subr.bf16.mxu0 0
    %837 = vmatpush1.bf16.msra.mxu0 %v691
    %838 = vmatprep.subr.bf16.mxu0 0
    %839 = vmatpush1.bf16.msra.mxu0 %v690
    %840 = vmatprep.subr.bf16.mxu0 0
    %841 = vmatpush1.bf16.msra.mxu0 %v689
    %842 = vmatprep.subr.bf16.mxu0 0
    %843 = vmatpush1.bf16.msra.mxu0 %v688
    %844 = vmatprep.subr.bf16.mxu0 0
    %845 = vmatpush1.bf16.msra.mxu0 %v687
    %846 = vmatprep.subr.bf16.mxu0 0
    %847 = vmatpush1.bf16.msra.mxu0 %v686
    %848 = vmatprep.subr.bf16.mxu0 0
    %849 = vmatpush2.bf16.msra.mxu0 %v701
    %850 = vmatprep.subr.bf16.mxu0 0
    %851 = vmatpush2.bf16.msra.mxu0 %v700
    %852 = vmatprep.subr.bf16.mxu0 0
    %853 = vmatpush2.bf16.msra.mxu0 %v699
    %854 = vmatprep.subr.bf16.mxu0 0
    %855 = vmatpush2.bf16.msra.mxu0 %v698
    %856 = vmatprep.subr.bf16.mxu0 0
    %857 = vmatpush2.bf16.msra.mxu0 %v697
    %858 = vmatprep.subr.bf16.mxu0 0
    %859 = vmatpush2.bf16.msra.mxu0 %v696
    %860 = vmatprep.subr.bf16.mxu0 0
    %861 = vmatpush2.bf16.msra.mxu0 %v695
    %862 = vmatprep.subr.bf16.mxu0 0
    %863 = vmatpush2.bf16.msra.mxu0 %v694
    %864 = vmatprep.mubr.bf16.mxu0 %v455
    %865 = vmatmul.mubr.bf16.gmra.mxu0 %v454
    %v866 = vpop.f32.mrf.mxu0
    %v867 = vadd.f32 %v826, %v866
    %v868 = vpop.f32.mrf.mxu0
    %v869 = vpop.f32.mrf.mxu0
    %v870 = vadd.f32 %v829, %v869
    %v871 = vpop.f32.mrf.mxu0
    %872 = vdwg.mxu0
    %v873 = vlaneseq
    %v874 = vand.u32 %v873, 127
    %v875 = vcvt.s32.f32 %v874
    %vm876 = vcmp.lt.s32.totalorder %v874, 10
    %v877 = vsel %vm876, %v867, -1e+30
    %v878 = vsel %vm876, %v870, -1e+30
    %879 = vmax.xlane.f32.xlu0 %v877
    %v880 = vpop.xlane.xlu0 %879
    %881 = vmax.xlane.f32.xlu0 %v878
    %v882 = vpop.xlane.xlu0 %881
    %vm883 = vcmp.ge.f32.partialorder %v877, %v880
    %vm884 = vcmp.ge.f32.partialorder %v878, %v882
    %v885 = vsel %vm883, %v875, 1e+30
    %v886 = vsel %vm884, %v875, 1e+30
    %887 = vmin.xlane.f32.xlu0 %v885
    %v888 = vpop.xlane.xlu0 %887
    %889 = vmin.xlane.f32.xlu0 %v886
    %v890 = vpop.xlane.xlu0 %889
    %v892 = vlaneseq
    %v893 = vshrl.u32 %v892, 7
    %v894 = vsub.s32 0, %v893
    %v895 = vrot.slane %v35, %v894
    %v896 = vlaneseq
    %v897 = vshrl.u32 %v896, 7
    %v898 = vsub.s32 1, %v897
    %v899 = vrot.slane %v35, %v898
    %v902 = vlaneseq
    %v903 = vshrl.u32 %v902, 7
    %v904 = vsub.s32 2, %v903
    %v905 = vrot.slane %v35, %v904
    %v906 = vlaneseq
    %v907 = vshrl.u32 %v906, 7
    %v908 = vsub.s32 3, %v907
    %v909 = vrot.slane %v35, %v908
    %v912 = vlaneseq
    %v913 = vshrl.u32 %v912, 7
    %v914 = vsub.s32 4, %v913
    %v915 = vrot.slane %v35, %v914
    %v916 = vlaneseq
    %v917 = vshrl.u32 %v916, 7
    %v918 = vsub.s32 5, %v917
    %v919 = vrot.slane %v35, %v918
    %vm922 = vcmask 1040384
    %v923 = vsel %vm922, %v895, %v905
    %v924 = vsel %vm922, %v899, %v909
    %vm925 = vcmask 1041408
    %v926 = vsel %vm925, %v923, %v915
    %v927 = vsel %vm925, %v924, %v919
    %v928 = vmul.f32 %v926, %v926
    %v929 = vmul.f32 %v927, %v927
    %v932 = vrot.slane %v928, 5
    %v933 = vrot.slane %v929, 5
    %v938 = vrot.slane %v926, 2
    %v939 = vrot.slane %v927, 2
    %vm942 = vcmask 1042432
    %v943 = vsel %vm942, %v926, %v932
    %v944 = vsel %vm942, %v927, %v933
    %vm945 = vcmask 1045504
    %v946 = vsel %vm945, %v943, %v938
    %v947 = vsel %vm945, %v944, %v939
    %948 = vmatprep.subr.mxu0 %v99
    %949 = vmatpush1.msra.mxu0 %v98
    %950 = vmatprep.subr.mxu0 %v97
    %951 = vmatpush1.msra.mxu0 %v96
    %952 = vmatprep.subr.mxu0 %v95
    %953 = vmatpush1.msra.mxu0 %v94
    %954 = vmatprep.subr.mxu0 %v93
    %955 = vmatpush1.msra.mxu0 %v92
    %956 = vmatprep.subr.mxu0 %v91
    %957 = vmatpush1.msra.mxu0 %v90
    %958 = vmatprep.subr.mxu0 %v89
    %959 = vmatpush1.msra.mxu0 %v88
    %960 = vmatprep.subr.mxu0 %v87
    %961 = vmatpush1.msra.mxu0 %v86
    %962 = vmatprep.subr.mxu0 %v85
    %963 = vmatpush1.msra.mxu0 %v84
    %964 = vmatprep.subr.mxu0 %v83
    %965 = vmatpush1.msra.mxu0 %v82
    %966 = vmatprep.subr.mxu0 %v81
    %967 = vmatpush1.msra.mxu0 %v80
    %968 = vmatprep.subr.mxu0 %v79
    %969 = vmatpush1.msra.mxu0 %v78
    %970 = vmatprep.subr.mxu0 %v77
    %971 = vmatpush1.msra.mxu0 %v76
    %972 = vmatprep.subr.mxu0 %v75
    %973 = vmatpush1.msra.mxu0 %v74
    %974 = vmatprep.subr.mxu0 %v73
    %975 = vmatpush1.msra.mxu0 %v72
    %976 = vmatprep.subr.mxu0 %v71
    %977 = vmatpush1.msra.mxu0 %v70
    %978 = vmatprep.subr.mxu0 %v69
    %979 = vmatpush1.msra.mxu0 %v68
    %980 = vmatprep.subr.mxu0 %v131
    %981 = vmatpush2.msra.mxu0 %v130
    %982 = vmatprep.subr.mxu0 %v129
    %983 = vmatpush2.msra.mxu0 %v128
    %984 = vmatprep.subr.mxu0 %v127
    %985 = vmatpush2.msra.mxu0 %v126
    %986 = vmatprep.subr.mxu0 %v125
    %987 = vmatpush2.msra.mxu0 %v124
    %988 = vmatprep.subr.mxu0 %v123
    %989 = vmatpush2.msra.mxu0 %v122
    %990 = vmatprep.subr.mxu0 %v121
    %991 = vmatpush2.msra.mxu0 %v120
    %992 = vmatprep.subr.mxu0 %v119
    %993 = vmatpush2.msra.mxu0 %v118
    %994 = vmatprep.subr.mxu0 %v117
    %995 = vmatpush2.msra.mxu0 %v116
    %996 = vmatprep.subr.mxu0 %v115
    %997 = vmatpush2.msra.mxu0 %v114
    %998 = vmatprep.subr.mxu0 %v113
    %999 = vmatpush2.msra.mxu0 %v112
    %1000 = vmatprep.subr.mxu0 %v111
    %1001 = vmatpush2.msra.mxu0 %v110
    %1002 = vmatprep.subr.mxu0 %v109
    %1003 = vmatpush2.msra.mxu0 %v108
    %1004 = vmatprep.subr.mxu0 %v107
    %1005 = vmatpush2.msra.mxu0 %v106
    %1006 = vmatprep.subr.mxu0 %v105
    %1007 = vmatpush2.msra.mxu0 %v104
    %1008 = vmatprep.subr.mxu0 %v103
    %1009 = vmatpush2.msra.mxu0 %v102
    %1010 = vmatprep.subr.mxu0 %v101
    %1011 = vmatpush2.msra.mxu0 %v100
    %1012 = vmatprep.mubr.f32.mxu0 %v947
    %1013 = vmatmul.mubr.f32.gmra.mxu0 %v946
    %v1014 = vpop.f32.mrf.mxu0
    %v1015 = vadd.f32 0.0, %v1014
    %v1016 = vpop.f32.mrf.mxu0
    %v1017 = vadd.f32 0.0, %v1016
    %1018 = vdwg.mxu0
    %v1019 = vmul.f32 %v1015, %v1015
    %v1020 = vmul.f32 %v1017, %v1017
    %v1023 = vrot.slane %v1019, 5
    %v1024 = vrot.slane %v1020, 5
    %v1027 = vsub.f32 %v1015, %v1023
    %v1028 = vsub.f32 %v1017, %v1024
    %v1029 = vlaneseq
    %v1030 = vshrl.u32 %v1029, 7
    %v1031 = vsub.s32 0, %v1030
    %v1032 = vrot.slane %v926, %v1031
    %v1033 = vlaneseq
    %v1034 = vshrl.u32 %v1033, 7
    %v1035 = vsub.s32 0, %v1034
    %v1036 = vrot.slane %v927, %v1035
    %v1037 = vlaneseq
    %v1038 = vshrl.u32 %v1037, 7
    %v1039 = vsub.s32 1, %v1038
    %v1040 = vrot.slane %v926, %v1039
    %v1041 = vlaneseq
    %v1042 = vshrl.u32 %v1041, 7
    %v1043 = vsub.s32 1, %v1042
    %v1044 = vrot.slane %v927, %v1043
    %v1045 = vlaneseq
    %v1046 = vshrl.u32 %v1045, 7
    %v1047 = vsub.s32 2, %v1046
    %v1048 = vrot.slane %v926, %v1047
    %v1049 = vlaneseq
    %v1050 = vshrl.u32 %v1049, 7
    %v1051 = vsub.s32 2, %v1050
    %v1052 = vrot.slane %v927, %v1051
    %v1053 = vlaneseq
    %v1054 = vshrl.u32 %v1053, 7
    %v1055 = vsub.s32 0, %v1054
    %v1056 = vrot.slane %v1015, %v1055
    %v1057 = vlaneseq
    %v1058 = vshrl.u32 %v1057, 7
    %v1059 = vsub.s32 0, %v1058
    %v1060 = vrot.slane %v1017, %v1059
    %v1061 = vlaneseq
    %v1062 = vshrl.u32 %v1061, 7
    %v1063 = vsub.s32 1, %v1062
    %v1064 = vrot.slane %v1015, %v1063
    %v1065 = vlaneseq
    %v1066 = vshrl.u32 %v1065, 7
    %v1067 = vsub.s32 1, %v1066
    %v1068 = vrot.slane %v1017, %v1067
    %v1069 = vlaneseq
    %v1070 = vshrl.u32 %v1069, 7
    %v1071 = vsub.s32 2, %v1070
    %v1072 = vrot.slane %v1015, %v1071
    %v1073 = vlaneseq
    %v1074 = vshrl.u32 %v1073, 7
    %v1075 = vsub.s32 2, %v1074
    %v1076 = vrot.slane %v1017, %v1075
    %v1077 = vlaneseq
    %v1078 = vshrl.u32 %v1077, 7
    %v1079 = vsub.s32 3, %v1078
    %v1080 = vrot.slane %v1027, %v1079
    %v1081 = vlaneseq
    %v1082 = vshrl.u32 %v1081, 7
    %v1083 = vsub.s32 3, %v1082
    %v1084 = vrot.slane %v1028, %v1083
    %v1085 = vlaneseq
    %v1086 = vshrl.u32 %v1085, 7
    %v1087 = vsub.s32 4, %v1086
    %v1088 = vrot.slane %v1027, %v1087
    %v1089 = vlaneseq
    %v1090 = vshrl.u32 %v1089, 7
    %v1091 = vsub.s32 4, %v1090
    %v1092 = vrot.slane %v1028, %v1091
    %v1093 = vlaneseq
    %v1094 = vshrl.u32 %v1093, 7
    %v1095 = vsub.s32 5, %v1094
    %v1096 = vrot.slane %v1027, %v1095
    %v1097 = vlaneseq
    %v1098 = vshrl.u32 %v1097, 7
    %v1099 = vsub.s32 5, %v1098
    %v1100 = vrot.slane %v1028, %v1099
    %v1101 = vmul.f32 %v29, %v29
    %v1102 = vmul.f32 %v30, %v30
    %v1103 = vmul.f32 %v31, %v31
    %v1104 = vmul.f32 %v32, %v32
    %v1105 = vmul.f32 %v33, %v33
    %v1106 = vmul.f32 %v34, %v34
    %v1107 = vmul.f32 %v29, %v1032
    %v1108 = vmul.f32 %v30, %v1036
    %v1109 = vmul.f32 %v31, %v1040
    %v1110 = vmul.f32 %v32, %v1044
    %v1111 = vmul.f32 %v33, %v1048
    %v1112 = vmul.f32 %v34, %v1052
    %v1113 = vmul.f32 %v428, %v428
    %v1114 = vmul.f32 %v430, %v430
    %v1115 = vmul.f32 %v432, %v432
    %v1116 = vmul.f32 %v434, %v434
    %v1117 = vmul.f32 %v438, %v438
    %v1118 = vmul.f32 %v440, %v440
    %v1119 = vmul.f32 %v428, %v1032
    %v1120 = vmul.f32 %v430, %v1036
    %v1121 = vmul.f32 %v432, %v1040
    %v1122 = vmul.f32 %v434, %v1044
    %v1123 = vmul.f32 %v438, %v1048
    %v1124 = vmul.f32 %v440, %v1052
    %1125 = vmatprep.subr.mxu0 %v99
    %1126 = vmatpush1.msra.mxu0 %v98
    %1127 = vmatprep.subr.mxu0 %v97
    %1128 = vmatpush1.msra.mxu0 %v96
    %1129 = vmatprep.subr.mxu0 %v95
    %1130 = vmatpush1.msra.mxu0 %v94
    %1131 = vmatprep.subr.mxu0 %v93
    %1132 = vmatpush1.msra.mxu0 %v92
    %1133 = vmatprep.subr.mxu0 %v91
    %1134 = vmatpush1.msra.mxu0 %v90
    %1135 = vmatprep.subr.mxu0 %v89
    %1136 = vmatpush1.msra.mxu0 %v88
    %1137 = vmatprep.subr.mxu0 %v87
    %1138 = vmatpush1.msra.mxu0 %v86
    %1139 = vmatprep.subr.mxu0 %v85
    %1140 = vmatpush1.msra.mxu0 %v84
    %1141 = vmatprep.subr.mxu0 %v83
    %1142 = vmatpush1.msra.mxu0 %v82
    %1143 = vmatprep.subr.mxu0 %v81
    %1144 = vmatpush1.msra.mxu0 %v80
    %1145 = vmatprep.subr.mxu0 %v79
    %1146 = vmatpush1.msra.mxu0 %v78
    %1147 = vmatprep.subr.mxu0 %v77
    %1148 = vmatpush1.msra.mxu0 %v76
    %1149 = vmatprep.subr.mxu0 %v75
    %1150 = vmatpush1.msra.mxu0 %v74
    %1151 = vmatprep.subr.mxu0 %v73
    %1152 = vmatpush1.msra.mxu0 %v72
    %1153 = vmatprep.subr.mxu0 %v71
    %1154 = vmatpush1.msra.mxu0 %v70
    %1155 = vmatprep.subr.mxu0 %v69
    %1156 = vmatpush1.msra.mxu0 %v68
    %1157 = vmatprep.subr.mxu0 %v131
    %1158 = vmatpush2.msra.mxu0 %v130
    %1159 = vmatprep.subr.mxu0 %v129
    %1160 = vmatpush2.msra.mxu0 %v128
    %1161 = vmatprep.subr.mxu0 %v127
    %1162 = vmatpush2.msra.mxu0 %v126
    %1163 = vmatprep.subr.mxu0 %v125
    %1164 = vmatpush2.msra.mxu0 %v124
    %1165 = vmatprep.subr.mxu0 %v123
    %1166 = vmatpush2.msra.mxu0 %v122
    %1167 = vmatprep.subr.mxu0 %v121
    %1168 = vmatpush2.msra.mxu0 %v120
    %1169 = vmatprep.subr.mxu0 %v119
    %1170 = vmatpush2.msra.mxu0 %v118
    %1171 = vmatprep.subr.mxu0 %v117
    %1172 = vmatpush2.msra.mxu0 %v116
    %1173 = vmatprep.subr.mxu0 %v115
    %1174 = vmatpush2.msra.mxu0 %v114
    %1175 = vmatprep.subr.mxu0 %v113
    %1176 = vmatpush2.msra.mxu0 %v112
    %1177 = vmatprep.subr.mxu0 %v111
    %1178 = vmatpush2.msra.mxu0 %v110
    %1179 = vmatprep.subr.mxu0 %v109
    %1180 = vmatpush2.msra.mxu0 %v108
    %1181 = vmatprep.subr.mxu0 %v107
    %1182 = vmatpush2.msra.mxu0 %v106
    %1183 = vmatprep.subr.mxu0 %v105
    %1184 = vmatpush2.msra.mxu0 %v104
    %1185 = vmatprep.subr.mxu0 %v103
    %1186 = vmatpush2.msra.mxu0 %v102
    %1187 = vmatprep.subr.mxu0 %v101
    %1188 = vmatpush2.msra.mxu0 %v100
    %1189 = vmatprep.mubr.f32.mxu0 %v30
    %1190 = vmatmul.mubr.f32.gmra.mxu0 %v29
    %v1191 = vpop.f32.mrf.mxu0
    %v1192 = vadd.f32 0.0, %v1191
    %v1193 = vpop.f32.mrf.mxu0
    %v1194 = vadd.f32 0.0, %v1193
    %1195 = vmatprep.mubr.f32.mxu0 %v32
    %1196 = vmatmul.mubr.f32.gmra.mxu0 %v31
    %v1197 = vpop.f32.mrf.mxu0
    %v1198 = vadd.f32 0.0, %v1197
    %v1199 = vpop.f32.mrf.mxu0
    %v1200 = vadd.f32 0.0, %v1199
    %1201 = vmatprep.mubr.f32.mxu0 %v34
    %1202 = vmatmul.mubr.f32.gmra.mxu0 %v33
    %v1203 = vpop.f32.mrf.mxu0
    %v1204 = vadd.f32 0.0, %v1203
    %v1205 = vpop.f32.mrf.mxu0
    %v1206 = vadd.f32 0.0, %v1205
    %1207 = vmatprep.mubr.f32.mxu0 %v1102
    %1208 = vmatmul.mubr.f32.gmra.mxu0 %v1101
    %v1209 = vpop.f32.mrf.mxu0
    %v1210 = vadd.f32 0.0, %v1209
    %v1211 = vpop.f32.mrf.mxu0
    %v1212 = vadd.f32 0.0, %v1211
    %1213 = vmatprep.mubr.f32.mxu0 %v1104
    %1214 = vmatmul.mubr.f32.gmra.mxu0 %v1103
    %v1215 = vpop.f32.mrf.mxu0
    %v1216 = vadd.f32 0.0, %v1215
    %v1217 = vpop.f32.mrf.mxu0
    %v1218 = vadd.f32 0.0, %v1217
    %1219 = vmatprep.mubr.f32.mxu0 %v1106
    %1220 = vmatmul.mubr.f32.gmra.mxu0 %v1105
    %v1221 = vpop.f32.mrf.mxu0
    %v1222 = vadd.f32 0.0, %v1221
    %v1223 = vpop.f32.mrf.mxu0
    %v1224 = vadd.f32 0.0, %v1223
    %1225 = vmatprep.mubr.f32.mxu0 %v1108
    %1226 = vmatmul.mubr.f32.gmra.mxu0 %v1107
    %v1227 = vpop.f32.mrf.mxu0
    %v1228 = vadd.f32 0.0, %v1227
    %v1229 = vpop.f32.mrf.mxu0
    %v1230 = vadd.f32 0.0, %v1229
    %1231 = vmatprep.mubr.f32.mxu0 %v1110
    %1232 = vmatmul.mubr.f32.gmra.mxu0 %v1109
    %v1233 = vpop.f32.mrf.mxu0
    %v1234 = vadd.f32 0.0, %v1233
    %v1235 = vpop.f32.mrf.mxu0
    %v1236 = vadd.f32 0.0, %v1235
    %1237 = vmatprep.mubr.f32.mxu0 %v1112
    %1238 = vmatmul.mubr.f32.gmra.mxu0 %v1111
    %v1239 = vpop.f32.mrf.mxu0
    %v1240 = vadd.f32 0.0, %v1239
    %v1241 = vpop.f32.mrf.mxu0
    %v1242 = vadd.f32 0.0, %v1241
    %1243 = vmatprep.mubr.f32.mxu0 %v430
    %1244 = vmatmul.mubr.f32.gmra.mxu0 %v428
    %v1245 = vpop.f32.mrf.mxu0
    %v1246 = vadd.f32 0.0, %v1245
    %v1247 = vpop.f32.mrf.mxu0
    %v1248 = vadd.f32 0.0, %v1247
    %1249 = vmatprep.mubr.f32.mxu0 %v434
    %1250 = vmatmul.mubr.f32.gmra.mxu0 %v432
    %v1251 = vpop.f32.mrf.mxu0
    %v1252 = vadd.f32 0.0, %v1251
    %v1253 = vpop.f32.mrf.mxu0
    %v1254 = vadd.f32 0.0, %v1253
    %1255 = vmatprep.mubr.f32.mxu0 %v440
    %1256 = vmatmul.mubr.f32.gmra.mxu0 %v438
    %v1257 = vpop.f32.mrf.mxu0
    %v1258 = vadd.f32 0.0, %v1257
    %v1259 = vpop.f32.mrf.mxu0
    %v1260 = vadd.f32 0.0, %v1259
    %1261 = vmatprep.mubr.f32.mxu0 %v1114
    %1262 = vmatmul.mubr.f32.gmra.mxu0 %v1113
    %v1263 = vpop.f32.mrf.mxu0
    %v1264 = vadd.f32 0.0, %v1263
    %v1265 = vpop.f32.mrf.mxu0
    %v1266 = vadd.f32 0.0, %v1265
    %1267 = vmatprep.mubr.f32.mxu0 %v1116
    %1268 = vmatmul.mubr.f32.gmra.mxu0 %v1115
    %v1269 = vpop.f32.mrf.mxu0
    %v1270 = vadd.f32 0.0, %v1269
    %v1271 = vpop.f32.mrf.mxu0
    %v1272 = vadd.f32 0.0, %v1271
    %1273 = vmatprep.mubr.f32.mxu0 %v1118
    %1274 = vmatmul.mubr.f32.gmra.mxu0 %v1117
    %v1275 = vpop.f32.mrf.mxu0
    %v1276 = vadd.f32 0.0, %v1275
    %v1277 = vpop.f32.mrf.mxu0
    %v1278 = vadd.f32 0.0, %v1277
    %1279 = vmatprep.mubr.f32.mxu0 %v1120
    %1280 = vmatmul.mubr.f32.gmra.mxu0 %v1119
    %v1281 = vpop.f32.mrf.mxu0
    %v1282 = vadd.f32 0.0, %v1281
    %v1283 = vpop.f32.mrf.mxu0
    %v1284 = vadd.f32 0.0, %v1283
    %1285 = vmatprep.mubr.f32.mxu0 %v1122
    %1286 = vmatmul.mubr.f32.gmra.mxu0 %v1121
    %v1287 = vpop.f32.mrf.mxu0
    %v1288 = vadd.f32 0.0, %v1287
    %v1289 = vpop.f32.mrf.mxu0
    %v1290 = vadd.f32 0.0, %v1289
    %1291 = vmatprep.mubr.f32.mxu0 %v1124
    %1292 = vmatmul.mubr.f32.gmra.mxu0 %v1123
    %v1293 = vpop.f32.mrf.mxu0
    %v1294 = vadd.f32 0.0, %v1293
    %v1295 = vpop.f32.mrf.mxu0
    %v1296 = vadd.f32 0.0, %v1295
    %1297 = vdwg.mxu0
    %v1298 = vmul.f32 %v1192, %v1192
    %v1299 = vmul.f32 %v1194, %v1194
    %v1300 = vmul.f32 %v1198, %v1198
    %v1301 = vmul.f32 %v1200, %v1200
    %v1302 = vmul.f32 %v1204, %v1204
    %v1303 = vmul.f32 %v1206, %v1206
    %v1304 = vsub.f32 %v1210, %v1298
    %v1305 = vsub.f32 %v1212, %v1299
    %v1306 = vsub.f32 %v1216, %v1300
    %v1307 = vsub.f32 %v1218, %v1301
    %v1308 = vsub.f32 %v1222, %v1302
    %v1309 = vsub.f32 %v1224, %v1303
    %v1310 = vmul.f32 %v1192, %v1056
    %v1311 = vmul.f32 %v1194, %v1060
    %v1312 = vmul.f32 %v1198, %v1064
    %v1313 = vmul.f32 %v1200, %v1068
    %v1314 = vmul.f32 %v1204, %v1072
    %v1315 = vmul.f32 %v1206, %v1076
    %v1316 = vsub.f32 %v1228, %v1310
    %v1317 = vsub.f32 %v1230, %v1311
    %v1318 = vsub.f32 %v1234, %v1312
    %v1319 = vsub.f32 %v1236, %v1313
    %v1320 = vsub.f32 %v1240, %v1314
    %v1321 = vsub.f32 %v1242, %v1315
    %v1322 = vmul.f32 %v1192, 2.0
    %v1323 = vmul.f32 %v1194, 2.0
    %v1324 = vmul.f32 %v1198, 2.0
    %v1325 = vmul.f32 %v1200, 2.0
    %v1326 = vmul.f32 %v1204, 2.0
    %v1327 = vmul.f32 %v1206, 2.0
    %v1328 = vmul.f32 %v1322, %v1056
    %v1329 = vmul.f32 %v1323, %v1060
    %v1330 = vmul.f32 %v1324, %v1064
    %v1331 = vmul.f32 %v1325, %v1068
    %v1332 = vmul.f32 %v1326, %v1072
    %v1333 = vmul.f32 %v1327, %v1076
    %v1334 = vadd.f32 %v1328, 0.0001
    %v1335 = vadd.f32 %v1329, 0.0001
    %v1336 = vadd.f32 %v1330, 0.0001
    %v1337 = vadd.f32 %v1331, 0.0001
    %v1338 = vadd.f32 %v1332, 0.0001
    %v1339 = vadd.f32 %v1333, 0.0001
    %v1340 = vmul.f32 %v1316, 2.0
    %v1341 = vmul.f32 %v1317, 2.0
    %v1342 = vmul.f32 %v1318, 2.0
    %v1343 = vmul.f32 %v1319, 2.0
    %v1344 = vmul.f32 %v1320, 2.0
    %v1345 = vmul.f32 %v1321, 2.0
    %v1346 = vadd.f32 %v1340, 0.0009
    %v1347 = vadd.f32 %v1341, 0.0009
    %v1348 = vadd.f32 %v1342, 0.0009
    %v1349 = vadd.f32 %v1343, 0.0009
    %v1350 = vadd.f32 %v1344, 0.0009
    %v1351 = vadd.f32 %v1345, 0.0009
    %v1352 = vmul.f32 %v1334, %v1346
    %v1353 = vmul.f32 %v1335, %v1347
    %v1354 = vmul.f32 %v1336, %v1348
    %v1355 = vmul.f32 %v1337, %v1349
    %v1356 = vmul.f32 %v1338, %v1350
    %v1357 = vmul.f32 %v1339, %v1351
    %v1358 = vmul.f32 %v1056, %v1056
    %v1359 = vmul.f32 %v1060, %v1060
    %v1360 = vmul.f32 %v1064, %v1064
    %v1361 = vmul.f32 %v1068, %v1068
    %v1362 = vmul.f32 %v1072, %v1072
    %v1363 = vmul.f32 %v1076, %v1076
    %v1364 = vadd.f32 %v1298, %v1358
    %v1365 = vadd.f32 %v1299, %v1359
    %v1366 = vadd.f32 %v1300, %v1360
    %v1367 = vadd.f32 %v1301, %v1361
    %v1368 = vadd.f32 %v1302, %v1362
    %v1369 = vadd.f32 %v1303, %v1363
    %v1370 = vadd.f32 %v1364, 0.0001
    %v1371 = vadd.f32 %v1365, 0.0001
    %v1372 = vadd.f32 %v1366, 0.0001
    %v1373 = vadd.f32 %v1367, 0.0001
    %v1374 = vadd.f32 %v1368, 0.0001
    %v1375 = vadd.f32 %v1369, 0.0001
    %v1376 = vadd.f32 %v1304, %v1080
    %v1377 = vadd.f32 %v1305, %v1084
    %v1378 = vadd.f32 %v1306, %v1088
    %v1379 = vadd.f32 %v1307, %v1092
    %v1380 = vadd.f32 %v1308, %v1096
    %v1381 = vadd.f32 %v1309, %v1100
    %v1382 = vadd.f32 %v1376, 0.0009
    %v1383 = vadd.f32 %v1377, 0.0009
    %v1384 = vadd.f32 %v1378, 0.0009
    %v1385 = vadd.f32 %v1379, 0.0009
    %v1386 = vadd.f32 %v1380, 0.0009
    %v1387 = vadd.f32 %v1381, 0.0009
    %v1388 = vmul.f32 %v1370, %v1382
    %v1389 = vmul.f32 %v1371, %v1383
    %v1390 = vmul.f32 %v1372, %v1384
    %v1391 = vmul.f32 %v1373, %v1385
    %v1392 = vmul.f32 %v1374, %v1386
    %v1393 = vmul.f32 %v1375, %v1387
    %v1394 = vrcp.pop %v1388
    %v1395 = vmul.f32 %v1352, %v1394
    %v1396 = vrcp.pop %v1389
    %v1397 = vmul.f32 %v1353, %v1396
    %v1398 = vrcp.pop %v1390
    %v1399 = vmul.f32 %v1354, %v1398
    %v1400 = vrcp.pop %v1391
    %v1401 = vmul.f32 %v1355, %v1400
    %v1402 = vrcp.pop %v1392
    %v1403 = vmul.f32 %v1356, %v1402
    %v1404 = vrcp.pop %v1393
    %v1405 = vmul.f32 %v1357, %v1404
    %vm1406 = vcmask 130048
    %v1407 = vsel %vm1406, %v1397, 0.0
    %v1408 = vadd.f32 %v1395, %v1407
    %1409 = vadd.xlane.f32.xlu0 %v1408
    %v1410 = vpop.xlane.xlu0 %1409
    %v1411 = vsel %vm1406, %v1401, 0.0
    %v1412 = vadd.f32 %v1399, %v1411
    %1413 = vadd.xlane.f32.xlu0 %v1412
    %v1414 = vpop.xlane.xlu0 %1413
    %v1415 = vsel %vm1406, %v1405, 0.0
    %v1416 = vadd.f32 %v1403, %v1415
    %1417 = vadd.xlane.f32.xlu0 %v1416
    %v1418 = vpop.xlane.xlu0 %1417
    %v1419 = vadd.f32 %v1410, %v1414
    %v1420 = vadd.f32 %v1419, %v1418
    %v1421 = vmul.f32 %v1420, 0.0023148148
    %v1422 = vmul.f32 %v1246, %v1246
    %v1423 = vmul.f32 %v1248, %v1248
    %v1424 = vmul.f32 %v1252, %v1252
    %v1425 = vmul.f32 %v1254, %v1254
    %v1426 = vmul.f32 %v1258, %v1258
    %v1427 = vmul.f32 %v1260, %v1260
    %v1428 = vsub.f32 %v1264, %v1422
    %v1429 = vsub.f32 %v1266, %v1423
    %v1430 = vsub.f32 %v1270, %v1424
    %v1431 = vsub.f32 %v1272, %v1425
    %v1432 = vsub.f32 %v1276, %v1426
    %v1433 = vsub.f32 %v1278, %v1427
    %v1434 = vmul.f32 %v1246, %v1056
    %v1435 = vmul.f32 %v1248, %v1060
    %v1436 = vmul.f32 %v1252, %v1064
    %v1437 = vmul.f32 %v1254, %v1068
    %v1438 = vmul.f32 %v1258, %v1072
    %v1439 = vmul.f32 %v1260, %v1076
    %v1440 = vsub.f32 %v1282, %v1434
    %v1441 = vsub.f32 %v1284, %v1435
    %v1442 = vsub.f32 %v1288, %v1436
    %v1443 = vsub.f32 %v1290, %v1437
    %v1444 = vsub.f32 %v1294, %v1438
    %v1445 = vsub.f32 %v1296, %v1439
    %v1446 = vmul.f32 %v1246, 2.0
    %v1447 = vmul.f32 %v1248, 2.0
    %v1448 = vmul.f32 %v1252, 2.0
    %v1449 = vmul.f32 %v1254, 2.0
    %v1450 = vmul.f32 %v1258, 2.0
    %v1451 = vmul.f32 %v1260, 2.0
    %v1452 = vmul.f32 %v1446, %v1056
    %v1453 = vmul.f32 %v1447, %v1060
    %v1454 = vmul.f32 %v1448, %v1064
    %v1455 = vmul.f32 %v1449, %v1068
    %v1456 = vmul.f32 %v1450, %v1072
    %v1457 = vmul.f32 %v1451, %v1076
    %v1458 = vadd.f32 %v1452, 0.0001
    %v1459 = vadd.f32 %v1453, 0.0001
    %v1460 = vadd.f32 %v1454, 0.0001
    %v1461 = vadd.f32 %v1455, 0.0001
    %v1462 = vadd.f32 %v1456, 0.0001
    %v1463 = vadd.f32 %v1457, 0.0001
    %v1464 = vmul.f32 %v1440, 2.0
    %v1465 = vmul.f32 %v1441, 2.0
    %v1466 = vmul.f32 %v1442, 2.0
    %v1467 = vmul.f32 %v1443, 2.0
    %v1468 = vmul.f32 %v1444, 2.0
    %v1469 = vmul.f32 %v1445, 2.0
    %v1470 = vadd.f32 %v1464, 0.0009
    %v1471 = vadd.f32 %v1465, 0.0009
    %v1472 = vadd.f32 %v1466, 0.0009
    %v1473 = vadd.f32 %v1467, 0.0009
    %v1474 = vadd.f32 %v1468, 0.0009
    %v1475 = vadd.f32 %v1469, 0.0009
    %v1476 = vmul.f32 %v1458, %v1470
    %v1477 = vmul.f32 %v1459, %v1471
    %v1478 = vmul.f32 %v1460, %v1472
    %v1479 = vmul.f32 %v1461, %v1473
    %v1480 = vmul.f32 %v1462, %v1474
    %v1481 = vmul.f32 %v1463, %v1475
    %v1482 = vadd.f32 %v1422, %v1358
    %v1483 = vadd.f32 %v1423, %v1359
    %v1484 = vadd.f32 %v1424, %v1360
    %v1485 = vadd.f32 %v1425, %v1361
    %v1486 = vadd.f32 %v1426, %v1362
    %v1487 = vadd.f32 %v1427, %v1363
    %v1488 = vadd.f32 %v1482, 0.0001
    %v1489 = vadd.f32 %v1483, 0.0001
    %v1490 = vadd.f32 %v1484, 0.0001
    %v1491 = vadd.f32 %v1485, 0.0001
    %v1492 = vadd.f32 %v1486, 0.0001
    %v1493 = vadd.f32 %v1487, 0.0001
    %v1494 = vadd.f32 %v1428, %v1080
    %v1495 = vadd.f32 %v1429, %v1084
    %v1496 = vadd.f32 %v1430, %v1088
    %v1497 = vadd.f32 %v1431, %v1092
    %v1498 = vadd.f32 %v1432, %v1096
    %v1499 = vadd.f32 %v1433, %v1100
    %v1500 = vadd.f32 %v1494, 0.0009
    %v1501 = vadd.f32 %v1495, 0.0009
    %v1502 = vadd.f32 %v1496, 0.0009
    %v1503 = vadd.f32 %v1497, 0.0009
    %v1504 = vadd.f32 %v1498, 0.0009
    %v1505 = vadd.f32 %v1499, 0.0009
    %v1506 = vmul.f32 %v1488, %v1500
    %v1507 = vmul.f32 %v1489, %v1501
    %v1508 = vmul.f32 %v1490, %v1502
    %v1509 = vmul.f32 %v1491, %v1503
    %v1510 = vmul.f32 %v1492, %v1504
    %v1511 = vmul.f32 %v1493, %v1505
    %v1512 = vrcp.pop %v1506
    %v1513 = vmul.f32 %v1476, %v1512
    %v1514 = vrcp.pop %v1507
    %v1515 = vmul.f32 %v1477, %v1514
    %v1516 = vrcp.pop %v1508
    %v1517 = vmul.f32 %v1478, %v1516
    %v1518 = vrcp.pop %v1509
    %v1519 = vmul.f32 %v1479, %v1518
    %v1520 = vrcp.pop %v1510
    %v1521 = vmul.f32 %v1480, %v1520
    %v1522 = vrcp.pop %v1511
    %v1523 = vmul.f32 %v1481, %v1522
    %v1524 = vsel %vm1406, %v1515, 0.0
    %v1525 = vadd.f32 %v1513, %v1524
    %1526 = vadd.xlane.f32.xlu0 %v1525
    %v1527 = vpop.xlane.xlu0 %1526
    %v1528 = vsel %vm1406, %v1519, 0.0
    %v1529 = vadd.f32 %v1517, %v1528
    %1530 = vadd.xlane.f32.xlu0 %v1529
    %v1531 = vpop.xlane.xlu0 %1530
    %v1532 = vsel %vm1406, %v1523, 0.0
    %v1533 = vadd.f32 %v1521, %v1532
    %1534 = vadd.xlane.f32.xlu0 %v1533
    %v1535 = vpop.xlane.xlu0 %1534
    %v1536 = vadd.f32 %v1527, %v1531
    %v1537 = vadd.f32 %v1536, %v1535
    %v1538 = vmul.f32 %v1537, 0.0023148148
    %vm1539 = vcmp.eq.s32.totalorder %v874, 1
    %vm1540 = vcmp.eq.s32.totalorder %v874, 0
    %v1541 = vsel %vm1540, %v888, 0.0
    %v1542 = vsel %vm1539, %v1421, %v1541
    %1543 = vst [vmem:[%s7] sm:$0xff] %v1542
    %v1544 = vsel %vm1540, %v890, 0.0
    %v1545 = vsel %vm1539, %v1538, %v1544
    %1546 = vst [vmem:[%s8] sm:$0xff] %v1545
    %v1547 = vlaneseq
    %v1548 = vshrl.u32 %v1547, 7
    %s1549 = smul.u32 0, 8
    %v1550 = vstv %s1549
    %v1551 = vadd.s32 %v1548, %v1550
    %vm1552 = vcmp.lt.s32.totalorder %v1551, 8
    %vm1553 = vcmp.ge.s32.totalorder %v1551, 9
    %vm1554 = vmand %vm1553, %vm1552
    %v1555 = vsel %vm1554, 1.0, 0.0
    %vm1556 = vcmp.ge.s32.totalorder %v1551, 1
    %vm1557 = vmand %vm1556, %vm1552
    %v1558 = vsel %vm1557, 1.0, 0.0
    %v1559 = vadd.f32 %v1555, %v1558
    %vm1560 = vcmp.ge.s32.totalorder %v1551, 4294967289
    %vm1561 = vmand %vm1560, %vm1552
    %v1562 = vsel %vm1561, 1.0, 0.0
    %v1563 = vmul.f32 %v29, %v1559
    %v1564 = vmul.f32 %v30, %v1559
    %v1565 = vmul.f32 %v31, %v1559
    %v1566 = vmul.f32 %v32, %v1559
    %v1567 = vmul.f32 %v33, %v1559
    %v1568 = vmul.f32 %v34, %v1559
    %v1569 = vrot.slane %v1563, 4
    %v1570 = vadd.f32 %v1563, %v1569
    %v1571 = vrot.slane %v1570, 2
    %v1572 = vadd.f32 %v1570, %v1571
    %v1573 = vrot.slane %v1572, 1
    %v1574 = vadd.f32 %v1572, %v1573
    %v1575 = vrot.slane %v1564, 4
    %v1576 = vadd.f32 %v1564, %v1575
    %v1577 = vrot.slane %v1576, 2
    %v1578 = vadd.f32 %v1576, %v1577
    %v1579 = vrot.slane %v1578, 1
    %v1580 = vadd.f32 %v1578, %v1579
    %v1581 = vrot.slane %v1565, 4
    %v1582 = vadd.f32 %v1565, %v1581
    %v1583 = vrot.slane %v1582, 2
    %v1584 = vadd.f32 %v1582, %v1583
    %v1585 = vrot.slane %v1584, 1
    %v1586 = vadd.f32 %v1584, %v1585
    %v1587 = vrot.slane %v1566, 4
    %v1588 = vadd.f32 %v1566, %v1587
    %v1589 = vrot.slane %v1588, 2
    %v1590 = vadd.f32 %v1588, %v1589
    %v1591 = vrot.slane %v1590, 1
    %v1592 = vadd.f32 %v1590, %v1591
    %v1593 = vrot.slane %v1567, 4
    %v1594 = vadd.f32 %v1567, %v1593
    %v1595 = vrot.slane %v1594, 2
    %v1596 = vadd.f32 %v1594, %v1595
    %v1597 = vrot.slane %v1596, 1
    %v1598 = vadd.f32 %v1596, %v1597
    %v1599 = vrot.slane %v1568, 4
    %v1600 = vadd.f32 %v1568, %v1599
    %v1601 = vrot.slane %v1600, 2
    %v1602 = vadd.f32 %v1600, %v1601
    %v1603 = vrot.slane %v1602, 1
    %v1604 = vadd.f32 %v1602, %v1603
    %v1605 = vmul.f32 %v428, %v1562
    %v1606 = vmul.f32 %v430, %v1562
    %v1607 = vmul.f32 %v432, %v1562
    %v1608 = vmul.f32 %v434, %v1562
    %v1609 = vmul.f32 %v438, %v1562
    %v1610 = vmul.f32 %v440, %v1562
    %v1611 = vrot.slane %v1605, 4
    %v1612 = vadd.f32 %v1605, %v1611
    %v1613 = vrot.slane %v1612, 2
    %v1614 = vadd.f32 %v1612, %v1613
    %v1615 = vrot.slane %v1614, 1
    %v1616 = vadd.f32 %v1614, %v1615
    %v1617 = vrot.slane %v1606, 4
    %v1618 = vadd.f32 %v1606, %v1617
    %v1619 = vrot.slane %v1618, 2
    %v1620 = vadd.f32 %v1618, %v1619
    %v1621 = vrot.slane %v1620, 1
    %v1622 = vadd.f32 %v1620, %v1621
    %v1623 = vrot.slane %v1607, 4
    %v1624 = vadd.f32 %v1607, %v1623
    %v1625 = vrot.slane %v1624, 2
    %v1626 = vadd.f32 %v1624, %v1625
    %v1627 = vrot.slane %v1626, 1
    %v1628 = vadd.f32 %v1626, %v1627
    %v1629 = vrot.slane %v1608, 4
    %v1630 = vadd.f32 %v1608, %v1629
    %v1631 = vrot.slane %v1630, 2
    %v1632 = vadd.f32 %v1630, %v1631
    %v1633 = vrot.slane %v1632, 1
    %v1634 = vadd.f32 %v1632, %v1633
    %v1635 = vrot.slane %v1609, 4
    %v1636 = vadd.f32 %v1609, %v1635
    %v1637 = vrot.slane %v1636, 2
    %v1638 = vadd.f32 %v1636, %v1637
    %v1639 = vrot.slane %v1638, 1
    %v1640 = vadd.f32 %v1638, %v1639
    %v1641 = vrot.slane %v1610, 4
    %v1642 = vadd.f32 %v1610, %v1641
    %v1643 = vrot.slane %v1642, 2
    %v1644 = vadd.f32 %v1642, %v1643
    %v1645 = vrot.slane %v1644, 1
    %v1646 = vadd.f32 %v1644, %v1645
    %v1647 = vadd.f32 %v1574, %v1616
    %v1648 = vadd.f32 %v1580, %v1622
    %v1649 = vadd.f32 %v1586, %v1628
    %v1650 = vadd.f32 %v1592, %v1634
    %v1651 = vadd.f32 %v1598, %v1640
    %v1652 = vadd.f32 %v1604, %v1646
    %v1653 = vmul.f32 %v1647, 0.06666667
    %v1654 = vmul.f32 %v1648, 0.06666667
    %v1655 = vmul.f32 %v1649, 0.06666667
    %v1656 = vmul.f32 %v1650, 0.06666667
    %v1657 = vmul.f32 %v1651, 0.06666667
    %v1658 = vmul.f32 %v1652, 0.06666667
    %vm1659 = vcmp.eq.s32.totalorder %v1548, 0
    %v1660 = vsel %vm1659, %v1653, 0.0
    %v1661 = vsel %vm1659, %v1654, 0.0
    %v1662 = vsel %vm1659, %v1655, 0.0
    %v1663 = vsel %vm1659, %v1656, 0.0
    %v1664 = vsel %vm1659, %v1657, 0.0
    %v1665 = vsel %vm1659, %v1658, 0.0
    %1666 = vst [vmem:[%s9] sm:$0xff] %v1660
    %1667 = vst [vmem:[%s9 + $0x8] sm:$0xff] %v1661
    %1668 = vst [vmem:[%s9 + $0x10] sm:$0xff] %v1662
    %1669 = vst [vmem:[%s9 + $0x18] sm:$0xff] %v1663
    %1670 = vst [vmem:[%s9 + $0x20] sm:$0xff] %v1664
    %1671 = vst [vmem:[%s9 + $0x28] sm:$0xff] %v1665
    // Predicated region
    $region26: #{_analyze.1} parent=1 // pred_check
      _
    $region27: #{_analyze.1} parent=1 // pred_check_branch
      %1673 = sbr.rel (0) target = $region29
    $region28: #{_analyze.1} parent=1 // pred_region
      %s1675 = ssub.s32 768, 768
      %1676 = vsyncadd [#allocation3], %s1675
      %s1678 = sshll.u32 [#allocation2], 4
      %s1679 = int_to_ptr.vmem [resolvable:$true] %s1678
      %1681 = dma.vmem_to_hbm [thread:$0]  %s1679, 768, %s6, [#allocation3]
    $region29: #{_analyze.1} parent=1 // pred_fallthru
      _
    // Predicated region
    $region30: #{_analyze.1} parent=1 // pred_check
      _
    $region31: #{_analyze.1} parent=1 // pred_check_branch
      %1683 = sbr.rel (0) target = $region33
    $region32: #{_analyze.1} parent=1 // pred_region
      _
    $region33: #{_analyze.1} parent=1 // pred_fallthru
      _
    // Predicated region
    $region34: #{_analyze.1} parent=1 // pred_check
      _
    $region35: #{_analyze.1} parent=1 // pred_check_branch
      %1685 = sbr.rel (0) target = $region37
    $region36: #{_analyze.1} parent=1 // pred_region
      _
    $region37: #{_analyze.1} parent=1 // pred_fallthru
      _
    // Predicated region
    $region38: #{_analyze.1} parent=1 // pred_check
      _
    $region39: #{_analyze.1} parent=1 // pred_check_branch
      %1687 = sbr.rel (0) target = $region41
    $region40: #{_analyze.1} parent=1 // pred_region
      _
    $region41: #{_analyze.1} parent=1 // pred_fallthru
      _
    // Predicated region
    $region42: #{_analyze.1} parent=1 // pred_check
      _
    $region43: #{_analyze.1} parent=1 // pred_check_branch
      %1689 = sbr.rel (0) target = $region45
    $region44: #{_analyze.1} parent=1 // pred_region
      %1690 = dma.done [#allocation3], 768
    $region45: #{_analyze.1} parent=1 // pred_fallthru
      _
    // Predicated region
    $region46: #{_analyze.1} parent=1 // pred_check
      _
    $region47: #{_analyze.1} parent=1 // pred_check_branch
      %1692 = sbr.rel (0) target = $region49
    $region48: #{_analyze.1} parent=1 // pred_region
      _
    $region49: #{_analyze.1} parent=1 // pred_fallthru
      _
    // Predicated region
    $region50: #{_analyze.1} parent=1 // pred_check
      _
    $region51: #{_analyze.1} parent=1 // pred_check_branch
      %1694 = sbr.rel (0) target = $region53
    $region52: #{_analyze.1} parent=1 // pred_region
      _
    $region53: #{_analyze.1} parent=1 // pred_fallthru
      _
    // Predicated region
    $region54: #{_analyze.1} parent=1 // pred_check
      _
    $region55: #{_analyze.1} parent=1 // pred_check_branch
      %1696 = sbr.rel (0) target = $region57
    $region56: #{_analyze.1} parent=1 // pred_region
      _
    $region57: #{_analyze.1} parent=1 // pred_fallthru
      _
    %1697 = vsyncpa [#allocation3], 1

</llo_original>
